<compile_context>
chip_gen: v7x
topology: tpu7x:2x2x1
jax: 0.10.0
libtpu: 0.0.40
codegen_flags: <defaults>
</compile_context>

<pallas_src>
import jax
import jax.numpy as jnp
from jax.experimental import pallas as pl
from jax.experimental.pallas import tpu as pltpu


def tokenizer_kernel(xc_ref, idx_ref, wexp_ref, emb_ref, bias_ref, bias_cat_ref,
                     out_ref):
    # xc_ref      : (bb, C1)   f32  ones column already prepended
    # idx_ref     : (bb, NC)   i32  category offsets already added
    # wexp_ref    : (C1, T*E)  f32  weight rows placed at their token's lane block
    # emb_ref     : (V, E)     f32  full embedding table (resident in VMEM)
    # bias_ref    : (1, T*E)   f32  flat bias row, zero CLS bias prepended
    # bias_cat_ref: (NC, E)    f32  categorical-token bias rows
    # out_ref     : (bb, T*E)  f32  lane-dense flat output rows
    C1 = xc_ref.shape[1]
    NC = idx_ref.shape[1]
    V, E = emb_ref.shape

    # Continuous + CLS tokens for every output lane at once; the categorical lane
    # blocks of W_expand are zero, so those lanes receive just the bias here.
    acc = jnp.dot(xc_ref[...], wexp_ref[...],
                  preferred_element_type=jnp.float32) + bias_ref[...]
    out_ref[...] = acc                      # single unmasked full-block store

    # Categorical tokens: exact gather as one-hot @ table on the MXU, one 2D matmul
    # with bb rows per categorical column; overwrite that token's E-lane slice.
    emb = emb_ref[...]                      # (V, E), hoisted out of the loop
    idx = idx_ref[...]                      # (bb, NC)
    iota_v = jax.lax.broadcasted_iota(jnp.int32, (1, V), 1)
    for n in range(NC):                     # NC is small and static
        one_hot = (iota_v == idx[:, n:n + 1]).astype(jnp.float32)      # (bb, V)
        tok = jnp.dot(one_hot, emb, preferred_element_type=jnp.float32)  # (bb, E)
        off = (C1 + n) * E
        out_ref[:, off:off + E] = tok + bias_cat_ref[n:n + 1, :]


def _round_up(n, m):
    return ((n + m - 1) // m) * m


def feature_tokenizer(x_conts, x_cats, weight, cat_weights, bias, category_offsets,
                      *, max_bb=512, vmem_block_budget=32 * 1024 * 1024):
    # TODO(synk): the PyTorch module also allows x_conts=None / x_cats=None; only the
    # "both present" path is implemented here.
    f32 = jnp.float32
    B = x_conts.shape[0]
    C1, E = weight.shape                     # C1 = cont_nums + 1
    NC = x_cats.shape[1]
    T = C1 + NC
    TE = T * E
    V = cat_weights.shape[0]

    # ---- cheap XLA-side glue / one-time constant preparation ----
    xc = jnp.concatenate([jnp.ones((B, 1), f32), x_conts.astype(f32)], axis=1)
    idx = (x_cats + category_offsets[None]).astype(jnp.int32)

    # W_expand[c, c*E + e] = weight[c, e]; categorical lane blocks are zero.
    w_expand = (jnp.eye(C1, dtype=f32)[:, :, None] *
                weight.astype(f32)[:, None, :]).reshape(C1, C1 * E)
    w_expand = jnp.pad(w_expand, ((0, 0), (0, NC * E)))           # (C1, T*E)

    bias_full = jnp.concatenate([jnp.zeros((1, E), f32), bias.astype(f32)], axis=0)
    bias_flat = bias_full.reshape(1, TE)                          # (1, T*E)
    bias_cat = bias_full[C1:, :]                                  # (NC, E)
    emb = cat_weights.astype(f32)                                 # (V, E)

    # ---- batch tile: as large as the VMEM budget allows; >= 2 grid steps if B > 8 ----
    # TODO(synk): for very large vocabularies the resident (V, E) table should switch
    # to a DMA-gather design (memory_space=pl.ANY + manual copies), esp. on v7x.
    const_bytes = 2 * 4 * (C1 * TE + V * E + TE + NC * E)   # worst case: double-buffered
    io_row_bytes = 2 * 4 * (TE + C1 + NC)                   # double-buffered streaming blocks
    bb = max(8, min(max_bb,
                    ((vmem_block_budget - const_bytes) // io_row_bytes) // 8 * 8))
    bb = min(bb, _round_up(B, 8))                           # never pad far beyond B
    if B > 8:                                               # keep >=2 steps for v7x megacore
        bb = max(8, min(bb, _round_up(-(-B // 2), 8)))
    B_pad = _round_up(B, bb)
    if B_pad != B:                                          # ragged batch: pad, drop later
        xc = jnp.pad(xc, ((0, B_pad - B), (0, 0)))
        idx = jnp.pad(idx, ((0, B_pad - B), (0, 0)))        # index 0 is a valid row
    grid = (B_pad // bb,)

    def make_call(single_buffer_consts):
        const_kw = ({"pipeline_mode": pl.Buffered(1)} if single_buffer_consts else {})

        def const_spec(shape):
            return pl.BlockSpec(shape, lambda b: (0,) * len(shape), **const_kw)

        return pl.pallas_call(
            tokenizer_kernel,
            out_shape=jax.ShapeDtypeStruct((B_pad, TE), f32),
            grid_spec=pltpu.PrefetchScalarGridSpec(
                num_scalar_prefetch=0,
                grid=grid,
                in_specs=[
                    pl.BlockSpec((bb, C1), lambda b: (b, 0)),
                    pl.BlockSpec((bb, NC), lambda b: (b, 0)),
                    const_spec((C1, TE)),
                    const_spec((V, E)),
                    const_spec((1, TE)),
                    const_spec((NC, E)),
                ],
                out_specs=pl.BlockSpec((bb, TE), lambda b: (b, 0)),
            ),
            compiler_params=pltpu.CompilerParams(
                dimension_semantics=("parallel",),
                vmem_limit_bytes=48 * 1024 * 1024,
            ),
        )

    args = (xc, idx, w_expand, emb, bias_flat, bias_cat)
    try:
        out_flat = make_call(True)(*args)
        jax.block_until_ready(out_flat)     # surface any compile/runtime error here
    except Exception:
        # pipeline_mode=pl.Buffered(1) unsupported on this jax build -> default buffering.
        out_flat = make_call(False)(*args)

    return out_flat[:B].reshape(B, T, E)


if __name__ == "__main__":
    # Small synthetic config consistent with the module's __init__.
    B = 16
    cont_nums = 6
    cat_dims = (3, 5, 7)
    emb_dim = 32
    n_cat = len(cat_dims)

    key = jax.random.PRNGKey(0)
    k_w, k_b, k_e, k_xc, k_xi = jax.random.split(key, 5)

    # Deterministic parameter init (shapes match nn.Parameter / nn.Embedding).
    weight = jax.random.normal(k_w, (cont_nums + 1, emb_dim), jnp.float32)
    bias = jax.random.normal(k_b, (cont_nums + n_cat, emb_dim), jnp.float32)
    cat_weights = jax.random.normal(k_e, (sum(cat_dims), emb_dim), jnp.float32)
    category_offsets = jnp.cumsum(
        jnp.asarray((0,) + cat_dims[:-1], dtype=jnp.int32))

    # Inputs.
    x_conts = jax.random.normal(k_xc, (B, cont_nums), jnp.float32)
    x_cats = jax.random.randint(k_xi, (B, n_cat), 0,
                                jnp.asarray(cat_dims, dtype=jnp.int32),
                                dtype=jnp.int32)

    out = feature_tokenizer(x_conts, x_cats, weight, cat_weights, bias,
                            category_offsets)
    out = jax.block_until_ready(out)

    # Pure-JAX reference check of the exact PyTorch semantics.
    xc_ref = jnp.concatenate([jnp.ones((B, 1), jnp.float32), x_conts], axis=1)
    ref_cont = weight[None] * xc_ref[:, :, None]
    ref_cat = cat_weights[x_cats + category_offsets[None]]
    bias_full = jnp.concatenate(
        [jnp.zeros((1, emb_dim), jnp.float32), bias], axis=0)
    ref = jnp.concatenate([ref_cont, ref_cat], axis=1) + bias_full[None]

    assert out.shape == (B, 1 + cont_nums + n_cat, emb_dim)
    assert jnp.allclose(out, ref, atol=1e-5, rtol=1e-5)
    print("KERNEL_OK")
</pallas_src>

<mosaic_0001>
module attributes {stable_mosaic.version = 11 : i64} {
  func.func @tokenizer_kernel(%arg0: i32, %arg1: memref<8x7xf32, #tpu.memory_space<vmem>>, %arg2: memref<8x3xi32, #tpu.memory_space<vmem>>, %arg3: memref<7x320xf32, #tpu.memory_space<vmem>>, %arg4: memref<15x32xf32, #tpu.memory_space<vmem>>, %arg5: memref<1x320xf32, #tpu.memory_space<vmem>>, %arg6: memref<3x32xf32, #tpu.memory_space<vmem>>, %arg7: memref<8x320xf32, #tpu.memory_space<vmem>>) attributes {dimension_semantics = [#tpu.dimension_semantics<parallel>], iteration_bounds = array<i64: 2>, scalar_prefetch = 0 : i64, scratch_operands = 0 : i64, tpu.core_type = #tpu.core_type<tc>, window_params = [{transform_indices = @transform_0, window_bounds = array<i64: 8, 7>}, {transform_indices = @transform_1, window_bounds = array<i64: 8, 3>}, {pipeline_mode = #tpu.pipeline_mode<synchronous>, transform_indices = @transform_2, window_bounds = array<i64: 7, 320>}, {pipeline_mode = #tpu.pipeline_mode<synchronous>, transform_indices = @transform_3, window_bounds = array<i64: 15, 32>}, {pipeline_mode = #tpu.pipeline_mode<synchronous>, transform_indices = @transform_4, window_bounds = array<i64: 1, 320>}, {pipeline_mode = #tpu.pipeline_mode<synchronous>, transform_indices = @transform_5, window_bounds = array<i64: 3, 32>}, {transform_indices = @transform_6, window_bounds = array<i64: 8, 320>}]} {
    %c0 = arith.constant 0 : index
    %c0_0 = arith.constant 0 : index
    %0 = vector.load %arg1[%c0, %c0_0] : memref<8x7xf32, #tpu.memory_space<vmem>>, vector<8x7xf32>
    %c0_1 = arith.constant 0 : index
    %c0_2 = arith.constant 0 : index
    %1 = vector.load %arg3[%c0_1, %c0_2] : memref<7x320xf32, #tpu.memory_space<vmem>>, vector<7x320xf32>
    %cst = arith.constant dense<0.000000e+00> : vector<8x320xf32>
    %2 = tpu.matmul %0, %1, %cst {dimension_numbers = #tpu.dot_dimension_numbers<[1], [0], [0], [1], [0, 0, 1, 1], [], []>} : vector<8x7xf32>, vector<7x320xf32>, vector<8x320xf32> -> vector<8x320xf32>
    %c0_3 = arith.constant 0 : index
    %c0_4 = arith.constant 0 : index
    %3 = vector.load %arg5[%c0_3, %c0_4] : memref<1x320xf32, #tpu.memory_space<vmem>>, vector<1x320xf32>
    %4 = vector.broadcast %3 : vector<1x320xf32> to vector<8x320xf32>
    %5 = arith.addf %2, %4 : vector<8x320xf32>
    %c0_5 = arith.constant 0 : index
    %c0_6 = arith.constant 0 : index
    %6 = vector.load %arg7[%c0_5, %c0_6] : memref<8x320xf32, #tpu.memory_space<vmem>>, vector<8x320xf32>
    tpu.vector_store %arg7[%c0_5, %c0_6], %5 {strides = array<i32>} : memref<8x320xf32, #tpu.memory_space<vmem>>, vector<8x320xf32>,
    %c0_7 = arith.constant 0 : index
    %c0_8 = arith.constant 0 : index
    %7 = vector.load %arg4[%c0_7, %c0_8] : memref<15x32xf32, #tpu.memory_space<vmem>>, vector<15x32xf32>
    %c0_9 = arith.constant 0 : index
    %c0_10 = arith.constant 0 : index
    %8 = vector.load %arg2[%c0_9, %c0_10] : memref<8x3xi32, #tpu.memory_space<vmem>>, vector<8x3xi32>
    %9 = tpu.iota {dimensions = array<i32: 1>} : vector<1x15xi32>
    %10 = vector.extract_strided_slice %8 {offsets = [0, 0], sizes = [8, 1], strides = [1, 1]} : vector<8x3xi32> to vector<8x1xi32>
    %11 = vector.broadcast %9 : vector<1x15xi32> to vector<8x15xi32>
    %12 = vector.broadcast %10 : vector<8x1xi32> to vector<8x15xi32>
    %13 = arith.cmpi eq, %11, %12 : vector<8x15xi32>
    %14 = arith.extui %13 : vector<8x15xi1> to vector<8x15xi32>
    %15 = arith.sitofp %14 : vector<8x15xi32> to vector<8x15xf32>
    %cst_11 = arith.constant dense<0.000000e+00> : vector<8x32xf32>
    %16 = tpu.matmul %15, %7, %cst_11 {dimension_numbers = #tpu.dot_dimension_numbers<[1], [0], [0], [1], [0, 0, 1, 1], [], []>} : vector<8x15xf32>, vector<15x32xf32>, vector<8x32xf32> -> vector<8x32xf32>
    %c0_12 = arith.constant 0 : index
    %c0_13 = arith.constant 0 : index
    %17 = vector.load %arg6[%c0_12, %c0_13] : memref<3x32xf32, #tpu.memory_space<vmem>>, vector<1x32xf32>
    %18 = vector.broadcast %17 : vector<1x32xf32> to vector<8x32xf32>
    %19 = arith.addf %16, %18 : vector<8x32xf32>
    %c0_14 = arith.constant 0 : index
    %c224 = arith.constant 224 : index
    %20 = vector.load %arg7[%c0_14, %c224] : memref<8x320xf32, #tpu.memory_space<vmem>>, vector<8x32xf32>
    tpu.vector_store %arg7[%c0_14, %c224], %19 {strides = array<i32>} : memref<8x320xf32, #tpu.memory_space<vmem>>, vector<8x32xf32>,
    %21 = vector.extract_strided_slice %8 {offsets = [0, 1], sizes = [8, 1], strides = [1, 1]} : vector<8x3xi32> to vector<8x1xi32>
    %22 = vector.broadcast %9 : vector<1x15xi32> to vector<8x15xi32>
    %23 = vector.broadcast %21 : vector<8x1xi32> to vector<8x15xi32>
    %24 = arith.cmpi eq, %22, %23 : vector<8x15xi32>
    %25 = arith.extui %24 : vector<8x15xi1> to vector<8x15xi32>
    %26 = arith.sitofp %25 : vector<8x15xi32> to vector<8x15xf32>
    %cst_15 = arith.constant dense<0.000000e+00> : vector<8x32xf32>
    %27 = tpu.matmul %26, %7, %cst_15 {dimension_numbers = #tpu.dot_dimension_numbers<[1], [0], [0], [1], [0, 0, 1, 1], [], []>} : vector<8x15xf32>, vector<15x32xf32>, vector<8x32xf32> -> vector<8x32xf32>
    %c1 = arith.constant 1 : index
    %c0_16 = arith.constant 0 : index
    %28 = vector.load %arg6[%c1, %c0_16] : memref<3x32xf32, #tpu.memory_space<vmem>>, vector<1x32xf32>
    %29 = vector.broadcast %28 : vector<1x32xf32> to vector<8x32xf32>
    %30 = arith.addf %27, %29 : vector<8x32xf32>
    %c0_17 = arith.constant 0 : index
    %c256 = arith.constant 256 : index
    %31 = vector.load %arg7[%c0_17, %c256] : memref<8x320xf32, #tpu.memory_space<vmem>>, vector<8x32xf32>
    tpu.vector_store %arg7[%c0_17, %c256], %30 {strides = array<i32>} : memref<8x320xf32, #tpu.memory_space<vmem>>, vector<8x32xf32>,
    %32 = vector.extract_strided_slice %8 {offsets = [0, 2], sizes = [8, 1], strides = [1, 1]} : vector<8x3xi32> to vector<8x1xi32>
    %33 = vector.broadcast %9 : vector<1x15xi32> to vector<8x15xi32>
    %34 = vector.broadcast %32 : vector<8x1xi32> to vector<8x15xi32>
    %35 = arith.cmpi eq, %33, %34 : vector<8x15xi32>
    %36 = arith.extui %35 : vector<8x15xi1> to vector<8x15xi32>
    %37 = arith.sitofp %36 : vector<8x15xi32> to vector<8x15xf32>
    %cst_18 = arith.constant dense<0.000000e+00> : vector<8x32xf32>
    %38 = tpu.matmul %37, %7, %cst_18 {dimension_numbers = #tpu.dot_dimension_numbers<[1], [0], [0], [1], [0, 0, 1, 1], [], []>} : vector<8x15xf32>, vector<15x32xf32>, vector<8x32xf32> -> vector<8x32xf32>
    %c2 = arith.constant 2 : index
    %c0_19 = arith.constant 0 : index
    %39 = vector.load %arg6[%c2, %c0_19] : memref<3x32xf32, #tpu.memory_space<vmem>>, vector<1x32xf32>
    %40 = vector.broadcast %39 : vector<1x32xf32> to vector<8x32xf32>
    %41 = arith.addf %38, %40 : vector<8x32xf32>
    %c0_20 = arith.constant 0 : index
    %c288 = arith.constant 288 : index
    %42 = vector.load %arg7[%c0_20, %c288] : memref<8x320xf32, #tpu.memory_space<vmem>>, vector<8x32xf32>
    tpu.vector_store %arg7[%c0_20, %c288], %41 {strides = array<i32>} : memref<8x320xf32, #tpu.memory_space<vmem>>, vector<8x32xf32>,
    return
  }
  func.func @transform_0(%arg0: i32) -> (i32, i32) {
    %c0_i32 = arith.constant 0 : i32
    %c0_i32_0 = arith.constant 0 : i32
    return %arg0, %c0_i32 : i32, i32
  }
  func.func @transform_1(%arg0: i32) -> (i32, i32) {
    %c0_i32 = arith.constant 0 : i32
    %c0_i32_0 = arith.constant 0 : i32
    return %arg0, %c0_i32 : i32, i32
  }
  func.func @transform_2(%arg0: i32) -> (i32, i32) {
    %c0_i32 = arith.constant 0 : i32
    %c0_i32_0 = arith.constant 0 : i32
    %c0_i32_1 = arith.constant 0 : i32
    return %c0_i32, %c0_i32_0 : i32, i32
  }
  func.func @transform_3(%arg0: i32) -> (i32, i32) {
    %c0_i32 = arith.constant 0 : i32
    %c0_i32_0 = arith.constant 0 : i32
    %c0_i32_1 = arith.constant 0 : i32
    return %c0_i32, %c0_i32_0 : i32, i32
  }
  func.func @transform_4(%arg0: i32) -> (i32, i32) {
    %c0_i32 = arith.constant 0 : i32
    %c0_i32_0 = arith.constant 0 : i32
    %c0_i32_1 = arith.constant 0 : i32
    return %c0_i32, %c0_i32_0 : i32, i32
  }
  func.func @transform_5(%arg0: i32) -> (i32, i32) {
    %c0_i32 = arith.constant 0 : i32
    %c0_i32_0 = arith.constant 0 : i32
    %c0_i32_1 = arith.constant 0 : i32
    return %c0_i32, %c0_i32_0 : i32, i32
  }
  func.func @transform_6(%arg0: i32) -> (i32, i32) {
    %c0_i32 = arith.constant 0 : i32
    %c0_i32_0 = arith.constant 0 : i32
    return %arg0, %c0_i32 : i32, i32
  }
}

module attributes {stable_mosaic.version = 11 : i64} {
  func.func @tokenizer_kernel(%arg0: i32, %arg1: memref<8x7xf32, #tpu.memory_space<vmem>>, %arg2: memref<8x3xi32, #tpu.memory_space<vmem>>, %arg3: memref<7x320xf32, #tpu.memory_space<vmem>>, %arg4: memref<15x32xf32, #tpu.memory_space<vmem>>, %arg5: memref<1x320xf32, #tpu.memory_space<vmem>>, %arg6: memref<3x32xf32, #tpu.memory_space<vmem>>, %arg7: memref<8x320xf32, #tpu.memory_space<vmem>>) attributes {dimension_semantics = [#tpu.dimension_semantics<parallel>], iteration_bounds = array<i64: 2>, scalar_prefetch = 0 : i64, scratch_operands = 0 : i64, tpu.core_type = #tpu.core_type<tc>, window_params = [{transform_indices = @transform_0, window_bounds = array<i64: 8, 7>}, {transform_indices = @transform_1, window_bounds = array<i64: 8, 3>}, {pipeline_mode = #tpu.pipeline_mode<synchronous>, transform_indices = @transform_2, window_bounds = array<i64: 7, 320>}, {pipeline_mode = #tpu.pipeline_mode<synchronous>, transform_indices = @transform_3, window_bounds = array<i64: 15, 32>}, {pipeline_mode = #tpu.pipeline_mode<synchronous>, transform_indices = @transform_4, window_bounds = array<i64: 1, 320>}, {pipeline_mode = #tpu.pipeline_mode<synchronous>, transform_indices = @transform_5, window_bounds = array<i64: 3, 32>}, {transform_indices = @transform_6, window_bounds = array<i64: 8, 320>}]} {
    %c0 = arith.constant 0 : index
    %c0_0 = arith.constant 0 : index
    %0 = vector.load %arg1[%c0, %c0_0] : memref<8x7xf32, #tpu.memory_space<vmem>>, vector<8x7xf32>
    %c0_1 = arith.constant 0 : index
    %c0_2 = arith.constant 0 : index
    %1 = vector.load %arg3[%c0_1, %c0_2] : memref<7x320xf32, #tpu.memory_space<vmem>>, vector<7x320xf32>
    %cst = arith.constant dense<0.000000e+00> : vector<8x320xf32>
    %2 = tpu.matmul %0, %1, %cst {dimension_numbers = #tpu.dot_dimension_numbers<[1], [0], [0], [1], [0, 0, 1, 1], [], []>} : vector<8x7xf32>, vector<7x320xf32>, vector<8x320xf32> -> vector<8x320xf32>
    %c0_3 = arith.constant 0 : index
    %c0_4 = arith.constant 0 : index
    %3 = vector.load %arg5[%c0_3, %c0_4] : memref<1x320xf32, #tpu.memory_space<vmem>>, vector<1x320xf32>
    %4 = vector.broadcast %3 : vector<1x320xf32> to vector<8x320xf32>
    %5 = arith.addf %2, %4 : vector<8x320xf32>
    %c0_5 = arith.constant 0 : index
    %c0_6 = arith.constant 0 : index
    %6 = vector.load %arg7[%c0_5, %c0_6] : memref<8x320xf32, #tpu.memory_space<vmem>>, vector<8x320xf32>
    tpu.vector_store %arg7[%c0_5, %c0_6], %5 {strides = array<i32>} : memref<8x320xf32, #tpu.memory_space<vmem>>, vector<8x320xf32>,
    %c0_7 = arith.constant 0 : index
    %c0_8 = arith.constant 0 : index
    %7 = vector.load %arg4[%c0_7, %c0_8] : memref<15x32xf32, #tpu.memory_space<vmem>>, vector<15x32xf32>
    %c0_9 = arith.constant 0 : index
    %c0_10 = arith.constant 0 : index
    %8 = vector.load %arg2[%c0_9, %c0_10] : memref<8x3xi32, #tpu.memory_space<vmem>>, vector<8x3xi32>
    %9 = tpu.iota {dimensions = array<i32: 1>} : vector<1x15xi32>
    %10 = vector.extract_strided_slice %8 {offsets = [0, 0], sizes = [8, 1], strides = [1, 1]} : vector<8x3xi32> to vector<8x1xi32>
    %11 = vector.broadcast %9 : vector<1x15xi32> to vector<8x15xi32>
    %12 = vector.broadcast %10 : vector<8x1xi32> to vector<8x15xi32>
    %13 = arith.cmpi eq, %11, %12 : vector<8x15xi32>
    %14 = arith.extui %13 : vector<8x15xi1> to vector<8x15xi32>
    %15 = arith.sitofp %14 : vector<8x15xi32> to vector<8x15xf32>
    %cst_11 = arith.constant dense<0.000000e+00> : vector<8x32xf32>
    %16 = tpu.matmul %15, %7, %cst_11 {dimension_numbers = #tpu.dot_dimension_numbers<[1], [0], [0], [1], [0, 0, 1, 1], [], []>} : vector<8x15xf32>, vector<15x32xf32>, vector<8x32xf32> -> vector<8x32xf32>
    %c0_12 = arith.constant 0 : index
    %c0_13 = arith.constant 0 : index
    %17 = vector.load %arg6[%c0_12, %c0_13] : memref<3x32xf32, #tpu.memory_space<vmem>>, vector<1x32xf32>
    %18 = vector.broadcast %17 : vector<1x32xf32> to vector<8x32xf32>
    %19 = arith.addf %16, %18 : vector<8x32xf32>
    %c0_14 = arith.constant 0 : index
    %c224 = arith.constant 224 : index
    %20 = vector.load %arg7[%c0_14, %c224] : memref<8x320xf32, #tpu.memory_space<vmem>>, vector<8x32xf32>
    tpu.vector_store %arg7[%c0_14, %c224], %19 {strides = array<i32>} : memref<8x320xf32, #tpu.memory_space<vmem>>, vector<8x32xf32>,
    %21 = vector.extract_strided_slice %8 {offsets = [0, 1], sizes = [8, 1], strides = [1, 1]} : vector<8x3xi32> to vector<8x1xi32>
    %22 = vector.broadcast %9 : vector<1x15xi32> to vector<8x15xi32>
    %23 = vector.broadcast %21 : vector<8x1xi32> to vector<8x15xi32>
    %24 = arith.cmpi eq, %22, %23 : vector<8x15xi32>
    %25 = arith.extui %24 : vector<8x15xi1> to vector<8x15xi32>
    %26 = arith.sitofp %25 : vector<8x15xi32> to vector<8x15xf32>
    %cst_15 = arith.constant dense<0.000000e+00> : vector<8x32xf32>
    %27 = tpu.matmul %26, %7, %cst_15 {dimension_numbers = #tpu.dot_dimension_numbers<[1], [0], [0], [1], [0, 0, 1, 1], [], []>} : vector<8x15xf32>, vector<15x32xf32>, vector<8x32xf32> -> vector<8x32xf32>
    %c1 = arith.constant 1 : index
    %c0_16 = arith.constant 0 : index
    %28 = vector.load %arg6[%c1, %c0_16] : memref<3x32xf32, #tpu.memory_space<vmem>>, vector<1x32xf32>
    %29 = vector.broadcast %28 : vector<1x32xf32> to vector<8x32xf32>
    %30 = arith.addf %27, %29 : vector<8x32xf32>
    %c0_17 = arith.constant 0 : index
    %c256 = arith.constant 256 : index
    %31 = vector.load %arg7[%c0_17, %c256] : memref<8x320xf32, #tpu.memory_space<vmem>>, vector<8x32xf32>
    tpu.vector_store %arg7[%c0_17, %c256], %30 {strides = array<i32>} : memref<8x320xf32, #tpu.memory_space<vmem>>, vector<8x32xf32>,
    %32 = vector.extract_strided_slice %8 {offsets = [0, 2], sizes = [8, 1], strides = [1, 1]} : vector<8x3xi32> to vector<8x1xi32>
    %33 = vector.broadcast %9 : vector<1x15xi32> to vector<8x15xi32>
    %34 = vector.broadcast %32 : vector<8x1xi32> to vector<8x15xi32>
    %35 = arith.cmpi eq, %33, %34 : vector<8x15xi32>
    %36 = arith.extui %35 : vector<8x15xi1> to vector<8x15xi32>
    %37 = arith.sitofp %36 : vector<8x15xi32> to vector<8x15xf32>
    %cst_18 = arith.constant dense<0.000000e+00> : vector<8x32xf32>
    %38 = tpu.matmul %37, %7, %cst_18 {dimension_numbers = #tpu.dot_dimension_numbers<[1], [0], [0], [1], [0, 0, 1, 1], [], []>} : vector<8x15xf32>, vector<15x32xf32>, vector<8x32xf32> -> vector<8x32xf32>
    %c2 = arith.constant 2 : index
    %c0_19 = arith.constant 0 : index
    %39 = vector.load %arg6[%c2, %c0_19] : memref<3x32xf32, #tpu.memory_space<vmem>>, vector<1x32xf32>
    %40 = vector.broadcast %39 : vector<1x32xf32> to vector<8x32xf32>
    %41 = arith.addf %38, %40 : vector<8x32xf32>
    %c0_20 = arith.constant 0 : index
    %c288 = arith.constant 288 : index
    %42 = vector.load %arg7[%c0_20, %c288] : memref<8x320xf32, #tpu.memory_space<vmem>>, vector<8x32xf32>
    tpu.vector_store %arg7[%c0_20, %c288], %41 {strides = array<i32>} : memref<8x320xf32, #tpu.memory_space<vmem>>, vector<8x32xf32>,
    return
  }
  func.func @transform_0(%arg0: i32) -> (i32, i32) {
    %c0_i32 = arith.constant 0 : i32
    %c0_i32_0 = arith.constant 0 : i32
    return %arg0, %c0_i32 : i32, i32
  }
  func.func @transform_1(%arg0: i32) -> (i32, i32) {
    %c0_i32 = arith.constant 0 : i32
    %c0_i32_0 = arith.constant 0 : i32
    return %arg0, %c0_i32 : i32, i32
  }
  func.func @transform_2(%arg0: i32) -> (i32, i32) {
    %c0_i32 = arith.constant 0 : i32
    %c0_i32_0 = arith.constant 0 : i32
    %c0_i32_1 = arith.constant 0 : i32
    return %c0_i32, %c0_i32_0 : i32, i32
  }
  func.func @transform_3(%arg0: i32) -> (i32, i32) {
    %c0_i32 = arith.constant 0 : i32
    %c0_i32_0 = arith.constant 0 : i32
    %c0_i32_1 = arith.constant 0 : i32
    return %c0_i32, %c0_i32_0 : i32, i32
  }
  func.func @transform_4(%arg0: i32) -> (i32, i32) {
    %c0_i32 = arith.constant 0 : i32
    %c0_i32_0 = arith.constant 0 : i32
    %c0_i32_1 = arith.constant 0 : i32
    return %c0_i32, %c0_i32_0 : i32, i32
  }
  func.func @transform_5(%arg0: i32) -> (i32, i32) {
    %c0_i32 = arith.constant 0 : i32
    %c0_i32_0 = arith.constant 0 : i32
    %c0_i32_1 = arith.constant 0 : i32
    return %c0_i32, %c0_i32_0 : i32, i32
  }
  func.func @transform_6(%arg0: i32) -> (i32, i32) {
    %c0_i32 = arith.constant 0 : i32
    %c0_i32_0 = arith.constant 0 : i32
    return %arg0, %c0_i32 : i32, i32
  }
}

</mosaic_0001>

<llo_original>
// kernel: tpu_custom_call.1
$region0: #{tpu_custom_call.1}
  #allocation0 [shape = 'u32[]', space=smem, size = 0x4, offset = 0x4, fixed_abs, tag = 'smem constant byte address 0x4 - core index']
  #allocation1 [shape = 'u32[144,128]{1,0:T(1,128)}', space=vmem, size = 0x12000, scoped, tag = 'internal scratch']
  %s0 = inlined_call_operand.vmem [shape: f32[16,7], index: 0, kind: input, shape index: {}]
  %s1 = inlined_call_operand.vmem [shape: s32[16,3], index: 1, kind: input, shape index: {}]
  %s2 = inlined_call_operand.vmem [shape: f32[7,320], index: 2, kind: input, shape index: {}]
  %s3 = inlined_call_operand.vmem [shape: f32[15,32], index: 3, kind: input, shape index: {}]
  %s4 = inlined_call_operand.vmem [shape: f32[1,320], index: 4, kind: input, shape index: {}]
  %s5 = inlined_call_operand.vmem [shape: f32[3,32], index: 5, kind: input, shape index: {}]
  %s6 = inlined_call_operand.hbm [shape: f32[16,320], index: 6, kind: output, shape index: {}]
  %s7 = sld [smem:[#allocation0]]
  $region57: #{tpu_custom_call.1} parent=0
    _
  %s9 = ssub.s32 1, %s7
  %s10 = scalar_select 0, %s9, %s7
  $region1: #{tpu_custom_call.1} parent=0
    #allocation2 [shape = 'u8[24576]{0}', space=vmem, size = 0x6000, scoped, tag = 'output window, operand 0']
    #allocation3 [shape = 's32[2]{0}', space=sflag, size = 0x8, scoped, tag = 'scoped memory for tpu_custom_call.1']
    %11 = vsyncpa [#allocation3], 0
    %s12 = scalar_lea.sflag [#allocation3], 1
    %13 = vsyncpa %s12, 0
    loop: start=0, step=1, limit=4
    $region2: #{tpu_custom_call.1} parent=1 // loop_pre_header
      _
    $region3: #{tpu_custom_call.1} parent=1 // loop_header
      %s15 = sphi 0, %s19
      %p16 = scmp.ge.s32.totalorder %s15, 4
      %s25 = sphi 0, %s27
      %s28 = sphi 0, %s25
      %s29 = sphi 0, %s28
      %s45 = sphi 0, %s29
      %s51 = sphi 0, %s53
      %s54 = sphi 0, %s51
      %s55 = sphi 0, %s54
      %s71 = sphi 0, %s55
      %s75 = sphi 0, %s75
      %s77 = sphi 0, %s75
      %s78 = sphi 0, %s77
      %s92 = sphi 0, %s78
      %s96 = sphi 0, %s96
      %s98 = sphi 0, %s96
      %s99 = sphi 0, %s98
      %s113 = sphi 0, %s99
      %s117 = sphi 0, %s117
      %s119 = sphi 0, %s117
      %s120 = sphi 0, %s119
      %s134 = sphi 0, %s120
      %s138 = sphi 0, %s138
      %s140 = sphi 0, %s138
      %s141 = sphi 0, %s140
      %s155 = sphi 0, %s141
      %s161 = sphi 0, %s163
      %s164 = sphi 0, %s161
      %s165 = sphi 0, %s164
      %s181 = sphi 0, %s165
    $region4: #{tpu_custom_call.1} parent=1 // loop_header_branch
      %18 = sbr.rel (%p16) target = $region8
    $region5: #{tpu_custom_call.1} parent=1 // loop_body
      %s20 = ssub.s32 %s15, 1
      %s21 = ssub.s32 %s15, 2
      %s22 = sadd.s32 %s15, 1
      %s23 = ssub.s32 %s15, %s22
      %p24 = scmp.eq.s32.totalorder %s23, 0
      %s26 = sadd.s32 %s25, 1
      %s27 = scalar_select %p24, %s25, %s26
      %p30 = pneg %p24
      %p31 = scmp.eq.s32.totalorder %s15, 1
      %p32 = por %p30, %p31
      %p33 = scmp.ne.s32.totalorder %s25, %s28
      %p34 = scmp.eq.s32.totalorder %s15, 0
      %p35 = por %p33, %p34
      %p36 = scmp.ne.s32.totalorder %s25, %s28
      %p37 = scmp.eq.s32.totalorder %s20, 1
      %p38 = por %p36, %p37
      %p39 = scmp.ne.s32.totalorder %s28, %s29
      %p40 = scmp.eq.s32.totalorder %s20, 0
      %p41 = por %p39, %p40
      %p42 = scmp.ne.s32.totalorder %s28, %s29
      %p43 = scmp.eq.s32.totalorder %s21, 1
      %p44 = por %p42, %p43
      %p46 = scmp.ne.s32.totalorder %s29, %s45
      %p47 = scmp.eq.s32.totalorder %s21, 0
      %p48 = por %p46, %p47
      %s49 = ssub.s32 %s15, %s22
      %p50 = scmp.eq.s32.totalorder %s49, 0
      %s52 = sadd.s32 %s51, 1
      %s53 = scalar_select %p50, %s51, %s52
      %p56 = pneg %p50
      %p57 = scmp.eq.s32.totalorder %s15, 1
      %p58 = por %p56, %p57
      %p59 = scmp.ne.s32.totalorder %s51, %s54
      %p60 = scmp.eq.s32.totalorder %s15, 0
      %p61 = por %p59, %p60
      %p62 = scmp.ne.s32.totalorder %s51, %s54
      %p63 = scmp.eq.s32.totalorder %s20, 1
      %p64 = por %p62, %p63
      %p65 = scmp.ne.s32.totalorder %s54, %s55
      %p66 = scmp.eq.s32.totalorder %s20, 0
      %p67 = por %p65, %p66
      %p68 = scmp.ne.s32.totalorder %s54, %s55
      %p69 = scmp.eq.s32.totalorder %s21, 1
      %p70 = por %p68, %p69
      %p72 = scmp.ne.s32.totalorder %s55, %s71
      %p73 = scmp.eq.s32.totalorder %s21, 0
      %p74 = por %p72, %p73
      %s76 = sadd.s32 %s75, 1
      %p79 = scmp.eq.s32.totalorder %s15, 1
      %p80 = scmp.ne.s32.totalorder %s75, %s77
      %p81 = scmp.eq.s32.totalorder %s15, 0
      %p82 = por %p80, %p81
      %p83 = scmp.ne.s32.totalorder %s75, %s77
      %p84 = scmp.eq.s32.totalorder %s20, 1
      %p85 = por %p83, %p84
      %p86 = scmp.ne.s32.totalorder %s77, %s78
      %p87 = scmp.eq.s32.totalorder %s20, 0
      %p88 = por %p86, %p87
      %p89 = scmp.ne.s32.totalorder %s77, %s78
      %p90 = scmp.eq.s32.totalorder %s21, 1
      %p91 = por %p89, %p90
      %p93 = scmp.ne.s32.totalorder %s78, %s92
      %p94 = scmp.eq.s32.totalorder %s21, 0
      %p95 = por %p93, %p94
      %s97 = sadd.s32 %s96, 1
      %p100 = scmp.eq.s32.totalorder %s15, 1
      %p101 = scmp.ne.s32.totalorder %s96, %s98
      %p102 = scmp.eq.s32.totalorder %s15, 0
      %p103 = por %p101, %p102
      %p104 = scmp.ne.s32.totalorder %s96, %s98
      %p105 = scmp.eq.s32.totalorder %s20, 1
      %p106 = por %p104, %p105
      %p107 = scmp.ne.s32.totalorder %s98, %s99
      %p108 = scmp.eq.s32.totalorder %s20, 0
      %p109 = por %p107, %p108
      %p110 = scmp.ne.s32.totalorder %s98, %s99
      %p111 = scmp.eq.s32.totalorder %s21, 1
      %p112 = por %p110, %p111
      %p114 = scmp.ne.s32.totalorder %s99, %s113
      %p115 = scmp.eq.s32.totalorder %s21, 0
      %p116 = por %p114, %p115
      %s118 = sadd.s32 %s117, 1
      %p121 = scmp.eq.s32.totalorder %s15, 1
      %p122 = scmp.ne.s32.totalorder %s117, %s119
      %p123 = scmp.eq.s32.totalorder %s15, 0
      %p124 = por %p122, %p123
      %p125 = scmp.ne.s32.totalorder %s117, %s119
      %p126 = scmp.eq.s32.totalorder %s20, 1
      %p127 = por %p125, %p126
      %p128 = scmp.ne.s32.totalorder %s119, %s120
      %p129 = scmp.eq.s32.totalorder %s20, 0
      %p130 = por %p128, %p129
      %p131 = scmp.ne.s32.totalorder %s119, %s120
      %p132 = scmp.eq.s32.totalorder %s21, 1
      %p133 = por %p131, %p132
      %p135 = scmp.ne.s32.totalorder %s120, %s134
      %p136 = scmp.eq.s32.totalorder %s21, 0
      %p137 = por %p135, %p136
      %s139 = sadd.s32 %s138, 1
      %p142 = scmp.eq.s32.totalorder %s15, 1
      %p143 = scmp.ne.s32.totalorder %s138, %s140
      %p144 = scmp.eq.s32.totalorder %s15, 0
      %p145 = por %p143, %p144
      %p146 = scmp.ne.s32.totalorder %s138, %s140
      %p147 = scmp.eq.s32.totalorder %s20, 1
      %p148 = por %p146, %p147
      %p149 = scmp.ne.s32.totalorder %s140, %s141
      %p150 = scmp.eq.s32.totalorder %s20, 0
      %p151 = por %p149, %p150
      %p152 = scmp.ne.s32.totalorder %s140, %s141
      %p153 = scmp.eq.s32.totalorder %s21, 1
      %p154 = por %p152, %p153
      %p156 = scmp.ne.s32.totalorder %s141, %s155
      %p157 = scmp.eq.s32.totalorder %s21, 0
      %p158 = por %p156, %p157
      %s159 = ssub.s32 %s15, %s22
      %p160 = scmp.eq.s32.totalorder %s159, 0
      %s162 = sadd.s32 %s161, 1
      %s163 = scalar_select %p160, %s161, %s162
      %p166 = pneg %p160
      %p167 = scmp.eq.s32.totalorder %s15, 1
      %p168 = por %p166, %p167
      %p169 = scmp.ne.s32.totalorder %s161, %s164
      %p170 = scmp.eq.s32.totalorder %s15, 0
      %p171 = por %p169, %p170
      %p172 = scmp.ne.s32.totalorder %s161, %s164
      %p173 = scmp.eq.s32.totalorder %s20, 1
      %p174 = por %p172, %p173
      %p175 = scmp.ne.s32.totalorder %s164, %s165
      %p176 = scmp.eq.s32.totalorder %s20, 0
      %p177 = por %p175, %p176
      %p178 = scmp.ne.s32.totalorder %s164, %s165
      %p179 = scmp.eq.s32.totalorder %s21, 1
      %p180 = por %p178, %p179
      %p182 = scmp.ne.s32.totalorder %s165, %s181
      %p183 = scmp.eq.s32.totalorder %s21, 0
      %p184 = por %p182, %p183
      %p185 = scmp.le.s32.totalorder 1, %s15
      %p186 = scmp.lt.s32.totalorder %s15, 3
      %p187 = pnand %p185, %p186
      %p188 = pneg %p187
      // Predicated region
      $region9: #{tpu_custom_call.1} parent=5 // pred_check
        _
      $region10: #{tpu_custom_call.1} parent=5 // pred_check_branch
        %190 = sbr.rel (%p187) target = $region12
      $region11: #{tpu_custom_call.1} parent=5 // pred_region
        %s191 = ssub.s32 %s15, 1
        // Predicated region
        $region13: #{tpu_custom_call.1} parent=11 // pred_check
          %p192 = pneg %p88
        $region14: #{tpu_custom_call.1} parent=11 // pred_check_branch
          %194 = sbr.rel (%p192) target = $region16
        $region15: #{tpu_custom_call.1} parent=11 // pred_region
          _
        $region16: #{tpu_custom_call.1} parent=11 // pred_fallthru
          _
        // Predicated region
        $region17: #{tpu_custom_call.1} parent=11 // pred_check
          %p195 = pneg %p109
        $region18: #{tpu_custom_call.1} parent=11 // pred_check_branch
          %197 = sbr.rel (%p195) target = $region20
        $region19: #{tpu_custom_call.1} parent=11 // pred_region
          _
        $region20: #{tpu_custom_call.1} parent=11 // pred_fallthru
          _
        // Predicated region
        $region21: #{tpu_custom_call.1} parent=11 // pred_check
          %p198 = pneg %p130
        $region22: #{tpu_custom_call.1} parent=11 // pred_check_branch
          %200 = sbr.rel (%p198) target = $region24
        $region23: #{tpu_custom_call.1} parent=11 // pred_region
          _
        $region24: #{tpu_custom_call.1} parent=11 // pred_fallthru
          _
        // Predicated region
        $region25: #{tpu_custom_call.1} parent=11 // pred_check
          %p201 = pneg %p151
        $region26: #{tpu_custom_call.1} parent=11 // pred_check_branch
          %203 = sbr.rel (%p201) target = $region28
        $region27: #{tpu_custom_call.1} parent=11 // pred_region
          _
        $region28: #{tpu_custom_call.1} parent=11 // pred_fallthru
          _
      $region12: #{tpu_custom_call.1} parent=5 // pred_fallthru
        _
      %p204 = scmp.lt.s32.totalorder %s15, 2
      // Predicated region
      $region29: #{tpu_custom_call.1} parent=5 // pred_check
        %p205 = pneg %p204
      $region30: #{tpu_custom_call.1} parent=5 // pred_check_branch
        %207 = sbr.rel (%p205) target = $region32
      $region31: #{tpu_custom_call.1} parent=5 // pred_region
        // Predicated region
        $region33: #{tpu_custom_call.1} parent=31 // pred_check
          %p208 = pneg %p35
        $region34: #{tpu_custom_call.1} parent=31 // pred_check_branch
          %210 = sbr.rel (%p208) target = $region36
        $region35: #{tpu_custom_call.1} parent=31 // pred_region
          %p211 = scmp.lt.s32.totalorder %s15, 1
          %s212 = scalar_select %p211, %s15, 1
          %s213 = smul.addr %s212, 8
          %s214 = scalar_lea.vmem %s0, %s213
        $region36: #{tpu_custom_call.1} parent=31 // pred_fallthru
          _
        // Predicated region
        $region37: #{tpu_custom_call.1} parent=31 // pred_check
          %p215 = pneg %p61
        $region38: #{tpu_custom_call.1} parent=31 // pred_check_branch
          %217 = sbr.rel (%p215) target = $region40
        $region39: #{tpu_custom_call.1} parent=31 // pred_region
          %p218 = scmp.lt.s32.totalorder %s15, 1
          %s219 = scalar_select %p218, %s15, 1
          %s220 = smul.addr %s219, 8
          %s221 = scalar_lea.vmem %s1, %s220
        $region40: #{tpu_custom_call.1} parent=31 // pred_fallthru
          _
      $region32: #{tpu_custom_call.1} parent=5 // pred_fallthru
        _
      %p222 = scmp.le.s32.totalorder 1, %s15
      %p223 = scmp.lt.s32.totalorder %s15, 3
      %p224 = pnand %p222, %p223
      %p225 = pneg %p224
      // Predicated region
      $region41: #{tpu_custom_call.1} parent=5 // pred_check
        _
      $region42: #{tpu_custom_call.1} parent=5 // pred_check_branch
        %227 = sbr.rel (%p224) target = $region44
      $region43: #{tpu_custom_call.1} parent=5 // pred_region
        %s228 = ssub.s32 %s15, 1
        %p229 = scmp.lt.s32.totalorder %s20, 1
        %s230 = scalar_select %p229, %s20, 1
        %s231 = smul.addr %s230, 8
        %s232 = scalar_lea.vmem %s0, %s231
        %p233 = pneg %p41
        %p234 = pneg %p38
        %p235 = scmp.lt.s32.totalorder %s20, 1
        %s236 = scalar_select %p235, %s20, 1
        %s237 = smul.addr %s236, 8
        %s238 = scalar_lea.vmem %s1, %s237
        %p239 = pneg %p67
        %p240 = pneg %p64
        %p241 = pneg %p88
        %p242 = pneg %p85
        %p243 = pneg %p109
        %p244 = pneg %p106
        %p245 = pneg %p130
        %p246 = pneg %p127
        %p247 = pneg %p151
        %p248 = pneg %p148
        %p249 = pneg %p177
        %p250 = pneg %p174
        %s251 = sand.u32 %s164, 1
        %s252 = scalar_lea.sflag [#allocation3], %s251
        %s253 = sand.u32 %s164, 1
        %s254 = smul.addr %s253, 24
        %s255 = scalar_lea.vmem [#allocation2], %s254
        %p256 = scmp.lt.s32.totalorder %s20, 1
        %s257 = scalar_select %p256, %s20, 1
        %s258 = smul.addr %s257, 8
        %s259 = scalar_lea.vmem %s0, %s258
        %p260 = scmp.lt.s32.totalorder %s20, 1
        %s261 = scalar_select %p260, %s20, 1
        %s262 = smul.addr %s261, 8
        %s263 = scalar_lea.vmem %s1, %s262
        %v264 = vld [vmem:[%s259] sm:$0xff]
        %v265 = vld [vmem:[%s2] sm:$0x7f]
        %v266 = vld [vmem:[%s2 + $0x8] sm:$0x7f]
        %v267 = vld [vmem:[%s2 + $0x10] sm:$0x7f]
        %v268 = vld [vmem:[%s4] sm:$0x7]
        %v270 = vlaneseq
        %v271 = vshrl.u32 %v270, 7
        %v272 = vsub.s32 0, %v271
        %v273 = vrot.slane %v268, %v272
        %v274 = vlaneseq
        %v275 = vshrl.u32 %v274, 7
        %v276 = vsub.s32 1, %v275
        %v277 = vrot.slane %v268, %v276
        %v278 = vlaneseq
        %v279 = vshrl.u32 %v278, 7
        %v280 = vsub.s32 2, %v279
        %v281 = vrot.slane %v268, %v280
        %vm285 = vcmask 56320
        %v287 = vsel %vm285, %v264, 0
        %vm289 = vcmask 1046528
        %v291 = vsel %vm289, %v265, 0
        %v294 = vsel %vm289, %v266, 0
        %v297 = vsel %vm289, %v267, 0
        %299 = vmatprep.subr.mxu0 %v294
        %300 = vmatpush1.msra.mxu0 %v291
        %301 = vmatprep.subr.mxu0 0.0
        %302 = vmatpush1.msra.mxu0 0.0
        %303 = vmatprep.subr.mxu0 0.0
        %304 = vmatpush1.msra.mxu0 0.0
        %305 = vmatprep.subr.mxu0 0.0
        %306 = vmatpush1.msra.mxu0 0.0
        %307 = vmatprep.subr.mxu0 0.0
        %308 = vmatpush1.msra.mxu0 0.0
        %309 = vmatprep.subr.mxu0 0.0
        %310 = vmatpush1.msra.mxu0 0.0
        %311 = vmatprep.subr.mxu0 0.0
        %312 = vmatpush1.msra.mxu0 0.0
        %313 = vmatprep.subr.mxu0 0.0
        %314 = vmatpush1.msra.mxu0 0.0
        %315 = vmatprep.subr.mxu0 0.0
        %316 = vmatpush1.msra.mxu0 0.0
        %317 = vmatprep.subr.mxu0 0.0
        %318 = vmatpush1.msra.mxu0 0.0
        %319 = vmatprep.subr.mxu0 0.0
        %320 = vmatpush1.msra.mxu0 0.0
        %321 = vmatprep.subr.mxu0 0.0
        %322 = vmatpush1.msra.mxu0 0.0
        %323 = vmatprep.subr.mxu0 0.0
        %324 = vmatpush1.msra.mxu0 0.0
        %325 = vmatprep.subr.mxu0 0.0
        %326 = vmatpush1.msra.mxu0 0.0
        %327 = vmatprep.subr.mxu0 0.0
        %328 = vmatpush1.msra.mxu0 0.0
        %329 = vmatprep.subr.mxu0 0.0
        %330 = vmatpush1.msra.mxu0 0.0
        %331 = vmatprep.subr.mxu0 0.0
        %332 = vmatpush1.msra.mxu0 0.0
        %333 = vmatprep.subr.mxu0 0.0
        %334 = vmatpush1.msra.mxu0 0.0
        %335 = vmatprep.subr.mxu0 0.0
        %336 = vmatpush1.msra.mxu0 0.0
        %337 = vmatprep.subr.mxu0 0.0
        %338 = vmatpush1.msra.mxu0 0.0
        %339 = vmatprep.subr.mxu0 0.0
        %340 = vmatpush1.msra.mxu0 0.0
        %341 = vmatprep.subr.mxu0 0.0
        %342 = vmatpush1.msra.mxu0 0.0
        %343 = vmatprep.subr.mxu0 0.0
        %344 = vmatpush1.msra.mxu0 0.0
        %345 = vmatprep.subr.mxu0 0.0
        %346 = vmatpush1.msra.mxu0 0.0
        %347 = vmatprep.subr.mxu0 0.0
        %348 = vmatpush1.msra.mxu0 0.0
        %349 = vmatprep.subr.mxu0 0.0
        %350 = vmatpush1.msra.mxu0 0.0
        %351 = vmatprep.subr.mxu0 0.0
        %352 = vmatpush1.msra.mxu0 0.0
        %353 = vmatprep.subr.mxu0 0.0
        %354 = vmatpush1.msra.mxu0 0.0
        %355 = vmatprep.subr.mxu0 0.0
        %356 = vmatpush1.msra.mxu0 0.0
        %357 = vmatprep.subr.mxu0 0.0
        %358 = vmatpush1.msra.mxu0 0.0
        %359 = vmatprep.subr.mxu0 0.0
        %360 = vmatpush1.msra.mxu0 0.0
        %361 = vmatprep.subr.mxu0 0.0
        %362 = vmatpush1.msra.mxu0 0.0
        %363 = vmatprep.mubr.f32.mxu0 0.0
        %364 = vmatmul.mubr.f32.gmra.mrb[0].mxu0 %v287
        %v365 = vpop.f32.mrb[0].mxu0
        %v366 = vadd.f32 %v273, %v365
        %v367 = vpop.f32.mrb[0].mxu0
        %v368 = vadd.f32 %v277, %v367
        %369 = vdwg.mxu0
        %370 = vmatprep.subr.mxu0 0.0
        %371 = vmatpush1.msra.mxu0 %v297
        %372 = vmatprep.subr.mxu0 0.0
        %373 = vmatpush1.msra.mxu0 0.0
        %374 = vmatprep.subr.mxu0 0.0
        %375 = vmatpush1.msra.mxu0 0.0
        %376 = vmatprep.subr.mxu0 0.0
        %377 = vmatpush1.msra.mxu0 0.0
        %378 = vmatprep.subr.mxu0 0.0
        %379 = vmatpush1.msra.mxu0 0.0
        %380 = vmatprep.subr.mxu0 0.0
        %381 = vmatpush1.msra.mxu0 0.0
        %382 = vmatprep.subr.mxu0 0.0
        %383 = vmatpush1.msra.mxu0 0.0
        %384 = vmatprep.subr.mxu0 0.0
        %385 = vmatpush1.msra.mxu0 0.0
        %386 = vmatprep.subr.mxu0 0.0
        %387 = vmatpush1.msra.mxu0 0.0
        %388 = vmatprep.subr.mxu0 0.0
        %389 = vmatpush1.msra.mxu0 0.0
        %390 = vmatprep.subr.mxu0 0.0
        %391 = vmatpush1.msra.mxu0 0.0
        %392 = vmatprep.subr.mxu0 0.0
        %393 = vmatpush1.msra.mxu0 0.0
        %394 = vmatprep.subr.mxu0 0.0
        %395 = vmatpush1.msra.mxu0 0.0
        %396 = vmatprep.subr.mxu0 0.0
        %397 = vmatpush1.msra.mxu0 0.0
        %398 = vmatprep.subr.mxu0 0.0
        %399 = vmatpush1.msra.mxu0 0.0
        %400 = vmatprep.subr.mxu0 0.0
        %401 = vmatpush1.msra.mxu0 0.0
        %402 = vmatprep.subr.mxu0 0.0
        %403 = vmatpush1.msra.mxu0 0.0
        %404 = vmatprep.subr.mxu0 0.0
        %405 = vmatpush1.msra.mxu0 0.0
        %406 = vmatprep.subr.mxu0 0.0
        %407 = vmatpush1.msra.mxu0 0.0
        %408 = vmatprep.subr.mxu0 0.0
        %409 = vmatpush1.msra.mxu0 0.0
        %410 = vmatprep.subr.mxu0 0.0
        %411 = vmatpush1.msra.mxu0 0.0
        %412 = vmatprep.subr.mxu0 0.0
        %413 = vmatpush1.msra.mxu0 0.0
        %414 = vmatprep.subr.mxu0 0.0
        %415 = vmatpush1.msra.mxu0 0.0
        %416 = vmatprep.subr.mxu0 0.0
        %417 = vmatpush1.msra.mxu0 0.0
        %418 = vmatprep.subr.mxu0 0.0
        %419 = vmatpush1.msra.mxu0 0.0
        %420 = vmatprep.subr.mxu0 0.0
        %421 = vmatpush1.msra.mxu0 0.0
        %422 = vmatprep.subr.mxu0 0.0
        %423 = vmatpush1.msra.mxu0 0.0
        %424 = vmatprep.subr.mxu0 0.0
        %425 = vmatpush1.msra.mxu0 0.0
        %426 = vmatprep.subr.mxu0 0.0
        %427 = vmatpush1.msra.mxu0 0.0
        %428 = vmatprep.subr.mxu0 0.0
        %429 = vmatpush1.msra.mxu0 0.0
        %430 = vmatprep.subr.mxu0 0.0
        %431 = vmatpush1.msra.mxu0 0.0
        %432 = vmatprep.subr.mxu0 0.0
        %433 = vmatpush1.msra.mxu0 0.0
        %434 = vmatprep.mubr.f32.mxu0 0.0
        %435 = vmatmul.mubr.f32.gmra.mrb[0].mxu0 %v287
        %v436 = vpop.f32.mrb[0].mxu0
        %v437 = vadd.f32 %v281, %v436
        %v438 = vpop.f32.mrb[0].mxu0
        %439 = vdwg.mxu0
        %440 = vst [vmem:[%s255] sm:$0xff] %v366
        %441 = vst [vmem:[%s255 + $0x8] sm:$0xff] %v368
        %vm442 = vcmask 523264
        %443 = vst.msk [vmem:[%s255 + $0x10] sm:$0xff] %vm442, %v437
        %v444 = vld [vmem:[%s3] sm:$0xff]
        %v445 = vld [vmem:[%s3 + $0x8] sm:$0x7f]
        %v446 = vld [vmem:[%s263] sm:$0xff]
        %v447 = vlaneseq
        %v448 = vand.u32 %v447, 127
        %449 = vset.pattern.permute.xlu0 0
        %450 = vperm.xlu0 %449, %v446
        %v451 = vpop.permute.xlu0 %450
        %vm452 = vcmp.eq.s32.totalorder %v448, %v451
        %v453 = vsel %vm452, 1, 0
        %v454 = vcvt.s32.f32 %v453
        %v455 = vld [vmem:[%s5] sm:$0x1]
        %v456 = vlaneseq
        %v457 = vshrl.u32 %v456, 7
        %v458 = vsub.s32 0, %v457
        %v459 = vrot.slane %v455, %v458
        %vm460 = vcmask 121856
        %v462 = vsel %vm460, %v454, 0
        %v465 = vsel %vm289, %v445, 0
        %467 = vmatprep.subr.mxu0 0.0
        %468 = vmatpush1.msra.mxu0 %v444
        %469 = vmatprep.subr.mxu0 0.0
        %470 = vmatpush1.msra.mxu0 %v465
        %471 = vmatprep.subr.mxu0 0.0
        %472 = vmatpush1.msra.mxu0 0.0
        %473 = vmatprep.subr.mxu0 0.0
        %474 = vmatpush1.msra.mxu0 0.0
        %475 = vmatprep.subr.mxu0 0.0
        %476 = vmatpush1.msra.mxu0 0.0
        %477 = vmatprep.subr.mxu0 0.0
        %478 = vmatpush1.msra.mxu0 0.0
        %479 = vmatprep.subr.mxu0 0.0
        %480 = vmatpush1.msra.mxu0 0.0
        %481 = vmatprep.subr.mxu0 0.0
        %482 = vmatpush1.msra.mxu0 0.0
        %483 = vmatprep.subr.mxu0 0.0
        %484 = vmatpush1.msra.mxu0 0.0
        %485 = vmatprep.subr.mxu0 0.0
        %486 = vmatpush1.msra.mxu0 0.0
        %487 = vmatprep.subr.mxu0 0.0
        %488 = vmatpush1.msra.mxu0 0.0
        %489 = vmatprep.subr.mxu0 0.0
        %490 = vmatpush1.msra.mxu0 0.0
        %491 = vmatprep.subr.mxu0 0.0
        %492 = vmatpush1.msra.mxu0 0.0
        %493 = vmatprep.subr.mxu0 0.0
        %494 = vmatpush1.msra.mxu0 0.0
        %495 = vmatprep.subr.mxu0 0.0
        %496 = vmatpush1.msra.mxu0 0.0
        %497 = vmatprep.subr.mxu0 0.0
        %498 = vmatpush1.msra.mxu0 0.0
        %499 = vmatprep.subr.mxu0 0.0
        %500 = vmatpush1.msra.mxu0 0.0
        %501 = vmatprep.subr.mxu0 0.0
        %502 = vmatpush1.msra.mxu0 0.0
        %503 = vmatprep.subr.mxu0 0.0
        %504 = vmatpush1.msra.mxu0 0.0
        %505 = vmatprep.subr.mxu0 0.0
        %506 = vmatpush1.msra.mxu0 0.0
        %507 = vmatprep.subr.mxu0 0.0
        %508 = vmatpush1.msra.mxu0 0.0
        %509 = vmatprep.subr.mxu0 0.0
        %510 = vmatpush1.msra.mxu0 0.0
        %511 = vmatprep.subr.mxu0 0.0
        %512 = vmatpush1.msra.mxu0 0.0
        %513 = vmatprep.subr.mxu0 0.0
        %514 = vmatpush1.msra.mxu0 0.0
        %515 = vmatprep.subr.mxu0 0.0
        %516 = vmatpush1.msra.mxu0 0.0
        %517 = vmatprep.subr.mxu0 0.0
        %518 = vmatpush1.msra.mxu0 0.0
        %519 = vmatprep.subr.mxu0 0.0
        %520 = vmatpush1.msra.mxu0 0.0
        %521 = vmatprep.subr.mxu0 0.0
        %522 = vmatpush1.msra.mxu0 0.0
        %523 = vmatprep.subr.mxu0 0.0
        %524 = vmatpush1.msra.mxu0 0.0
        %525 = vmatprep.subr.mxu0 0.0
        %526 = vmatpush1.msra.mxu0 0.0
        %527 = vmatprep.subr.mxu0 0.0
        %528 = vmatpush1.msra.mxu0 0.0
        %529 = vmatprep.subr.mxu0 0.0
        %530 = vmatpush1.msra.mxu0 0.0
        %531 = vmatprep.mubr.f32.mxu0 0.0
        %532 = vmatmul.mubr.f32.gmra.mrb[0].mxu0 %v462
        %v533 = vpop.f32.mrb[0].mxu0
        %v534 = vadd.f32 %v459, %v533
        %v535 = vpop.f32.mrb[0].mxu0
        %536 = vdwg.mxu0
        %538 = vrot.lane.b32.xlu0 %v534, 96
        %v539 = vpop.permute.xlu0 %538
        %vm541 = vcmask 1048320
        %542 = vst.msk [vmem:[%s255 + $0x8] sm:$0xff] %vm541, %v539
        %543 = vset.pattern.permute.xlu0 1
        %544 = vperm.xlu0 %543, %v446
        %v545 = vpop.permute.xlu0 %544
        %vm546 = vcmp.eq.s32.totalorder %v448, %v545
        %v547 = vsel %vm546, 1, 0
        %v548 = vcvt.s32.f32 %v547
        %v549 = vld [vmem:[%s5 + $0x1] sm:$0x1]
        %v550 = vlaneseq
        %v551 = vshrl.u32 %v550, 7
        %v552 = vsub.s32 0, %v551
        %v553 = vrot.slane %v549, %v552
        %v555 = vsel %vm460, %v548, 0
        %557 = vmatprep.subr.mxu0 0.0
        %558 = vmatpush1.msra.mxu0 %v444
        %559 = vmatprep.subr.mxu0 0.0
        %560 = vmatpush1.msra.mxu0 %v465
        %561 = vmatprep.subr.mxu0 0.0
        %562 = vmatpush1.msra.mxu0 0.0
        %563 = vmatprep.subr.mxu0 0.0
        %564 = vmatpush1.msra.mxu0 0.0
        %565 = vmatprep.subr.mxu0 0.0
        %566 = vmatpush1.msra.mxu0 0.0
        %567 = vmatprep.subr.mxu0 0.0
        %568 = vmatpush1.msra.mxu0 0.0
        %569 = vmatprep.subr.mxu0 0.0
        %570 = vmatpush1.msra.mxu0 0.0
        %571 = vmatprep.subr.mxu0 0.0
        %572 = vmatpush1.msra.mxu0 0.0
        %573 = vmatprep.subr.mxu0 0.0
        %574 = vmatpush1.msra.mxu0 0.0
        %575 = vmatprep.subr.mxu0 0.0
        %576 = vmatpush1.msra.mxu0 0.0
        %577 = vmatprep.subr.mxu0 0.0
        %578 = vmatpush1.msra.mxu0 0.0
        %579 = vmatprep.subr.mxu0 0.0
        %580 = vmatpush1.msra.mxu0 0.0
        %581 = vmatprep.subr.mxu0 0.0
        %582 = vmatpush1.msra.mxu0 0.0
        %583 = vmatprep.subr.mxu0 0.0
        %584 = vmatpush1.msra.mxu0 0.0
        %585 = vmatprep.subr.mxu0 0.0
        %586 = vmatpush1.msra.mxu0 0.0
        %587 = vmatprep.subr.mxu0 0.0
        %588 = vmatpush1.msra.mxu0 0.0
        %589 = vmatprep.subr.mxu0 0.0
        %590 = vmatpush1.msra.mxu0 0.0
        %591 = vmatprep.subr.mxu0 0.0
        %592 = vmatpush1.msra.mxu0 0.0
        %593 = vmatprep.subr.mxu0 0.0
        %594 = vmatpush1.msra.mxu0 0.0
        %595 = vmatprep.subr.mxu0 0.0
        %596 = vmatpush1.msra.mxu0 0.0
        %597 = vmatprep.subr.mxu0 0.0
        %598 = vmatpush1.msra.mxu0 0.0
        %599 = vmatprep.subr.mxu0 0.0
        %600 = vmatpush1.msra.mxu0 0.0
        %601 = vmatprep.subr.mxu0 0.0
        %602 = vmatpush1.msra.mxu0 0.0
        %603 = vmatprep.subr.mxu0 0.0
        %604 = vmatpush1.msra.mxu0 0.0
        %605 = vmatprep.subr.mxu0 0.0
        %606 = vmatpush1.msra.mxu0 0.0
        %607 = vmatprep.subr.mxu0 0.0
        %608 = vmatpush1.msra.mxu0 0.0
        %609 = vmatprep.subr.mxu0 0.0
        %610 = vmatpush1.msra.mxu0 0.0
        %611 = vmatprep.subr.mxu0 0.0
        %612 = vmatpush1.msra.mxu0 0.0
        %613 = vmatprep.subr.mxu0 0.0
        %614 = vmatpush1.msra.mxu0 0.0
        %615 = vmatprep.subr.mxu0 0.0
        %616 = vmatpush1.msra.mxu0 0.0
        %617 = vmatprep.subr.mxu0 0.0
        %618 = vmatpush1.msra.mxu0 0.0
        %619 = vmatprep.subr.mxu0 0.0
        %620 = vmatpush1.msra.mxu0 0.0
        %621 = vmatprep.mubr.f32.mxu0 0.0
        %622 = vmatmul.mubr.f32.gmra.mrb[0].mxu0 %v555
        %v623 = vpop.f32.mrb[0].mxu0
        %v624 = vadd.f32 %v553, %v623
        %v625 = vpop.f32.mrb[0].mxu0
        %626 = vdwg.mxu0
        %vm627 = vcmask 261120
        %628 = vst.msk [vmem:[%s255 + $0x10] sm:$0xff] %vm627, %v624
        %629 = vset.pattern.permute.xlu0 2
        %630 = vperm.xlu0 %629, %v446
        %v631 = vpop.permute.xlu0 %630
        %vm632 = vcmp.eq.s32.totalorder %v448, %v631
        %v633 = vsel %vm632, 1, 0
        %v634 = vcvt.s32.f32 %v633
        %v635 = vld [vmem:[%s5 + $0x2] sm:$0x1]
        %v636 = vlaneseq
        %v637 = vshrl.u32 %v636, 7
        %v638 = vsub.s32 0, %v637
        %v639 = vrot.slane %v635, %v638
        %v641 = vsel %vm460, %v634, 0
        %643 = vmatprep.subr.mxu0 0.0
        %644 = vmatpush1.msra.mxu0 %v444
        %645 = vmatprep.subr.mxu0 0.0
        %646 = vmatpush1.msra.mxu0 %v465
        %647 = vmatprep.subr.mxu0 0.0
        %648 = vmatpush1.msra.mxu0 0.0
        %649 = vmatprep.subr.mxu0 0.0
        %650 = vmatpush1.msra.mxu0 0.0
        %651 = vmatprep.subr.mxu0 0.0
        %652 = vmatpush1.msra.mxu0 0.0
        %653 = vmatprep.subr.mxu0 0.0
        %654 = vmatpush1.msra.mxu0 0.0
        %655 = vmatprep.subr.mxu0 0.0
        %656 = vmatpush1.msra.mxu0 0.0
        %657 = vmatprep.subr.mxu0 0.0
        %658 = vmatpush1.msra.mxu0 0.0
        %659 = vmatprep.subr.mxu0 0.0
        %660 = vmatpush1.msra.mxu0 0.0
        %661 = vmatprep.subr.mxu0 0.0
        %662 = vmatpush1.msra.mxu0 0.0
        %663 = vmatprep.subr.mxu0 0.0
        %664 = vmatpush1.msra.mxu0 0.0
        %665 = vmatprep.subr.mxu0 0.0
        %666 = vmatpush1.msra.mxu0 0.0
        %667 = vmatprep.subr.mxu0 0.0
        %668 = vmatpush1.msra.mxu0 0.0
        %669 = vmatprep.subr.mxu0 0.0
        %670 = vmatpush1.msra.mxu0 0.0
        %671 = vmatprep.subr.mxu0 0.0
        %672 = vmatpush1.msra.mxu0 0.0
        %673 = vmatprep.subr.mxu0 0.0
        %674 = vmatpush1.msra.mxu0 0.0
        %675 = vmatprep.subr.mxu0 0.0
        %676 = vmatpush1.msra.mxu0 0.0
        %677 = vmatprep.subr.mxu0 0.0
        %678 = vmatpush1.msra.mxu0 0.0
        %679 = vmatprep.subr.mxu0 0.0
        %680 = vmatpush1.msra.mxu0 0.0
        %681 = vmatprep.subr.mxu0 0.0
        %682 = vmatpush1.msra.mxu0 0.0
        %683 = vmatprep.subr.mxu0 0.0
        %684 = vmatpush1.msra.mxu0 0.0
        %685 = vmatprep.subr.mxu0 0.0
        %686 = vmatpush1.msra.mxu0 0.0
        %687 = vmatprep.subr.mxu0 0.0
        %688 = vmatpush1.msra.mxu0 0.0
        %689 = vmatprep.subr.mxu0 0.0
        %690 = vmatpush1.msra.mxu0 0.0
        %691 = vmatprep.subr.mxu0 0.0
        %692 = vmatpush1.msra.mxu0 0.0
        %693 = vmatprep.subr.mxu0 0.0
        %694 = vmatpush1.msra.mxu0 0.0
        %695 = vmatprep.subr.mxu0 0.0
        %696 = vmatpush1.msra.mxu0 0.0
        %697 = vmatprep.subr.mxu0 0.0
        %698 = vmatpush1.msra.mxu0 0.0
        %699 = vmatprep.subr.mxu0 0.0
        %700 = vmatpush1.msra.mxu0 0.0
        %701 = vmatprep.subr.mxu0 0.0
        %702 = vmatpush1.msra.mxu0 0.0
        %703 = vmatprep.subr.mxu0 0.0
        %704 = vmatpush1.msra.mxu0 0.0
        %705 = vmatprep.subr.mxu0 0.0
        %706 = vmatpush1.msra.mxu0 0.0
        %707 = vmatprep.mubr.f32.mxu0 0.0
        %708 = vmatmul.mubr.f32.gmra.mrb[0].mxu0 %v641
        %v709 = vpop.f32.mrb[0].mxu0
        %v710 = vadd.f32 %v639, %v709
        %v711 = vpop.f32.mrb[0].mxu0
        %712 = vdwg.mxu0
        %714 = vrot.lane.b32.xlu0 %v710, 32
        %v715 = vpop.permute.xlu0 %714
        %vm717 = vcmask 523520
        %718 = vst.msk [vmem:[%s255 + $0x10] sm:$0xff] %vm717, %v715
        %s719 = sand.u32 %s164, 1
        %s720 = scalar_lea.sflag [#allocation3], %s719
        %s721 = sand.u32 %s164, 1
        %s722 = smul.addr %s721, 24
        %s723 = scalar_lea.vmem [#allocation2], %s722
        // Predicated region
        $region45: #{tpu_custom_call.1} parent=43 // pred_check
          %p724 = pneg %p174
        $region46: #{tpu_custom_call.1} parent=43 // pred_check_branch
          %726 = sbr.rel (%p724) target = $region48
        $region47: #{tpu_custom_call.1} parent=43 // pred_region
          %s728 = ssub.s32 384, 384
          %729 = vsyncadd %s720, %s728
          %s730 = smul.addr %s20, 3
          %s731 = smul.addr %s730, 128
          %s732 = scalar_lea.hbm %s6, %s731
          %s734 = sshll.u32 %s723, 4
          %s735 = int_to_ptr.vmem [resolvable:$true] %s734
          %737 = dma.vmem_to_hbm [thread:$0]  %s735, 384, %s732, %s720
        $region48: #{tpu_custom_call.1} parent=43 // pred_fallthru
          _
      $region44: #{tpu_custom_call.1} parent=5 // pred_fallthru
        _
      %p738 = scmp.le.s32.totalorder 2, %s15
      // Predicated region
      $region49: #{tpu_custom_call.1} parent=5 // pred_check
        %p739 = pneg %p738
      $region50: #{tpu_custom_call.1} parent=5 // pred_check_branch
        %741 = sbr.rel (%p739) target = $region52
      $region51: #{tpu_custom_call.1} parent=5 // pred_region
        %s742 = ssub.s32 %s15, 2
        // Predicated region
        $region53: #{tpu_custom_call.1} parent=51 // pred_check
          %p743 = pneg %p180
        $region54: #{tpu_custom_call.1} parent=51 // pred_check_branch
          %745 = sbr.rel (%p743) target = $region56
        $region55: #{tpu_custom_call.1} parent=51 // pred_region
          %s746 = sand.u32 %s165, 1
          %s747 = scalar_lea.sflag [#allocation3], %s746
          %s748 = sand.u32 %s165, 1
          %s749 = smul.addr %s748, 24
          %s750 = scalar_lea.vmem [#allocation2], %s749
          %751 = dma.done %s747, 384
        $region56: #{tpu_custom_call.1} parent=51 // pred_fallthru
          _
      $region52: #{tpu_custom_call.1} parent=5 // pred_fallthru
        _
    $region6: #{tpu_custom_call.1} parent=1 // loop_footer
      %s19 = sadd.s32 1, %s15
    $region7: #{tpu_custom_call.1} parent=1 // loop_footer_branch
      %14 = sbr.rel target = $region3
    $region8: #{tpu_custom_call.1} parent=1 // loop_exit
      _
    %752 = vsyncpa [#allocation3], 1
    %s753 = scalar_lea.sflag [#allocation3], 1
    %754 = vsyncpa %s753, 1

// kernel: tpu_custom_call.1
$region0: #{tpu_custom_call.1}
  #allocation0 [shape = 'u32[]', space=smem, size = 0x4, offset = 0x4, fixed_abs, tag = 'smem constant byte address 0x4 - core index']
  #allocation1 [shape = 'u32[144,128]{1,0:T(1,128)}', space=vmem, size = 0x12000, scoped, tag = 'internal scratch']
  %s0 = inlined_call_operand.vmem [shape: f32[16,7], index: 0, kind: input, shape index: {}]
  %s1 = inlined_call_operand.vmem [shape: s32[16,3], index: 1, kind: input, shape index: {}]
  %s2 = inlined_call_operand.vmem [shape: f32[7,320], index: 2, kind: input, shape index: {}]
  %s3 = inlined_call_operand.vmem [shape: f32[15,32], index: 3, kind: input, shape index: {}]
  %s4 = inlined_call_operand.vmem [shape: f32[1,320], index: 4, kind: input, shape index: {}]
  %s5 = inlined_call_operand.vmem [shape: f32[3,32], index: 5, kind: input, shape index: {}]
  %s6 = inlined_call_operand.hbm [shape: f32[16,320], index: 6, kind: output, shape index: {}]
  %s7 = sld [smem:[#allocation0]]
  $region57: #{tpu_custom_call.1} parent=0
    _
  %s9 = ssub.s32 1, %s7
  %s10 = scalar_select 0, %s9, %s7
  $region1: #{tpu_custom_call.1} parent=0
    #allocation2 [shape = 'u8[24576]{0}', space=vmem, size = 0x6000, scoped, tag = 'output window, operand 0']
    #allocation3 [shape = 's32[2]{0}', space=sflag, size = 0x8, scoped, tag = 'scoped memory for tpu_custom_call.1']
    %11 = vsyncpa [#allocation3], 0
    %s12 = scalar_lea.sflag [#allocation3], 1
    %13 = vsyncpa %s12, 0
    loop: start=0, step=1, limit=4
    $region2: #{tpu_custom_call.1} parent=1 // loop_pre_header
      _
    $region3: #{tpu_custom_call.1} parent=1 // loop_header
      %s15 = sphi 0, %s19
      %p16 = scmp.ge.s32.totalorder %s15, 4
      %s25 = sphi 0, %s27
      %s28 = sphi 0, %s25
      %s29 = sphi 0, %s28
      %s45 = sphi 0, %s29
      %s51 = sphi 0, %s53
      %s54 = sphi 0, %s51
      %s55 = sphi 0, %s54
      %s71 = sphi 0, %s55
      %s75 = sphi 0, %s75
      %s77 = sphi 0, %s75
      %s78 = sphi 0, %s77
      %s92 = sphi 0, %s78
      %s96 = sphi 0, %s96
      %s98 = sphi 0, %s96
      %s99 = sphi 0, %s98
      %s113 = sphi 0, %s99
      %s117 = sphi 0, %s117
      %s119 = sphi 0, %s117
      %s120 = sphi 0, %s119
      %s134 = sphi 0, %s120
      %s138 = sphi 0, %s138
      %s140 = sphi 0, %s138
      %s141 = sphi 0, %s140
      %s155 = sphi 0, %s141
      %s161 = sphi 0, %s163
      %s164 = sphi 0, %s161
      %s165 = sphi 0, %s164
      %s181 = sphi 0, %s165
    $region4: #{tpu_custom_call.1} parent=1 // loop_header_branch
      %18 = sbr.rel (%p16) target = $region8
    $region5: #{tpu_custom_call.1} parent=1 // loop_body
      %s20 = ssub.s32 %s15, 1
      %s21 = ssub.s32 %s15, 2
      %s22 = sadd.s32 %s15, 1
      %s23 = ssub.s32 %s15, %s22
      %p24 = scmp.eq.s32.totalorder %s23, 0
      %s26 = sadd.s32 %s25, 1
      %s27 = scalar_select %p24, %s25, %s26
      %p30 = pneg %p24
      %p31 = scmp.eq.s32.totalorder %s15, 1
      %p32 = por %p30, %p31
      %p33 = scmp.ne.s32.totalorder %s25, %s28
      %p34 = scmp.eq.s32.totalorder %s15, 0
      %p35 = por %p33, %p34
      %p36 = scmp.ne.s32.totalorder %s25, %s28
      %p37 = scmp.eq.s32.totalorder %s20, 1
      %p38 = por %p36, %p37
      %p39 = scmp.ne.s32.totalorder %s28, %s29
      %p40 = scmp.eq.s32.totalorder %s20, 0
      %p41 = por %p39, %p40
      %p42 = scmp.ne.s32.totalorder %s28, %s29
      %p43 = scmp.eq.s32.totalorder %s21, 1
      %p44 = por %p42, %p43
      %p46 = scmp.ne.s32.totalorder %s29, %s45
      %p47 = scmp.eq.s32.totalorder %s21, 0
      %p48 = por %p46, %p47
      %s49 = ssub.s32 %s15, %s22
      %p50 = scmp.eq.s32.totalorder %s49, 0
      %s52 = sadd.s32 %s51, 1
      %s53 = scalar_select %p50, %s51, %s52
      %p56 = pneg %p50
      %p57 = scmp.eq.s32.totalorder %s15, 1
      %p58 = por %p56, %p57
      %p59 = scmp.ne.s32.totalorder %s51, %s54
      %p60 = scmp.eq.s32.totalorder %s15, 0
      %p61 = por %p59, %p60
      %p62 = scmp.ne.s32.totalorder %s51, %s54
      %p63 = scmp.eq.s32.totalorder %s20, 1
      %p64 = por %p62, %p63
      %p65 = scmp.ne.s32.totalorder %s54, %s55
      %p66 = scmp.eq.s32.totalorder %s20, 0
      %p67 = por %p65, %p66
      %p68 = scmp.ne.s32.totalorder %s54, %s55
      %p69 = scmp.eq.s32.totalorder %s21, 1
      %p70 = por %p68, %p69
      %p72 = scmp.ne.s32.totalorder %s55, %s71
      %p73 = scmp.eq.s32.totalorder %s21, 0
      %p74 = por %p72, %p73
      %s76 = sadd.s32 %s75, 1
      %p79 = scmp.eq.s32.totalorder %s15, 1
      %p80 = scmp.ne.s32.totalorder %s75, %s77
      %p81 = scmp.eq.s32.totalorder %s15, 0
      %p82 = por %p80, %p81
      %p83 = scmp.ne.s32.totalorder %s75, %s77
      %p84 = scmp.eq.s32.totalorder %s20, 1
      %p85 = por %p83, %p84
      %p86 = scmp.ne.s32.totalorder %s77, %s78
      %p87 = scmp.eq.s32.totalorder %s20, 0
      %p88 = por %p86, %p87
      %p89 = scmp.ne.s32.totalorder %s77, %s78
      %p90 = scmp.eq.s32.totalorder %s21, 1
      %p91 = por %p89, %p90
      %p93 = scmp.ne.s32.totalorder %s78, %s92
      %p94 = scmp.eq.s32.totalorder %s21, 0
      %p95 = por %p93, %p94
      %s97 = sadd.s32 %s96, 1
      %p100 = scmp.eq.s32.totalorder %s15, 1
      %p101 = scmp.ne.s32.totalorder %s96, %s98
      %p102 = scmp.eq.s32.totalorder %s15, 0
      %p103 = por %p101, %p102
      %p104 = scmp.ne.s32.totalorder %s96, %s98
      %p105 = scmp.eq.s32.totalorder %s20, 1
      %p106 = por %p104, %p105
      %p107 = scmp.ne.s32.totalorder %s98, %s99
      %p108 = scmp.eq.s32.totalorder %s20, 0
      %p109 = por %p107, %p108
      %p110 = scmp.ne.s32.totalorder %s98, %s99
      %p111 = scmp.eq.s32.totalorder %s21, 1
      %p112 = por %p110, %p111
      %p114 = scmp.ne.s32.totalorder %s99, %s113
      %p115 = scmp.eq.s32.totalorder %s21, 0
      %p116 = por %p114, %p115
      %s118 = sadd.s32 %s117, 1
      %p121 = scmp.eq.s32.totalorder %s15, 1
      %p122 = scmp.ne.s32.totalorder %s117, %s119
      %p123 = scmp.eq.s32.totalorder %s15, 0
      %p124 = por %p122, %p123
      %p125 = scmp.ne.s32.totalorder %s117, %s119
      %p126 = scmp.eq.s32.totalorder %s20, 1
      %p127 = por %p125, %p126
      %p128 = scmp.ne.s32.totalorder %s119, %s120
      %p129 = scmp.eq.s32.totalorder %s20, 0
      %p130 = por %p128, %p129
      %p131 = scmp.ne.s32.totalorder %s119, %s120
      %p132 = scmp.eq.s32.totalorder %s21, 1
      %p133 = por %p131, %p132
      %p135 = scmp.ne.s32.totalorder %s120, %s134
      %p136 = scmp.eq.s32.totalorder %s21, 0
      %p137 = por %p135, %p136
      %s139 = sadd.s32 %s138, 1
      %p142 = scmp.eq.s32.totalorder %s15, 1
      %p143 = scmp.ne.s32.totalorder %s138, %s140
      %p144 = scmp.eq.s32.totalorder %s15, 0
      %p145 = por %p143, %p144
      %p146 = scmp.ne.s32.totalorder %s138, %s140
      %p147 = scmp.eq.s32.totalorder %s20, 1
      %p148 = por %p146, %p147
      %p149 = scmp.ne.s32.totalorder %s140, %s141
      %p150 = scmp.eq.s32.totalorder %s20, 0
      %p151 = por %p149, %p150
      %p152 = scmp.ne.s32.totalorder %s140, %s141
      %p153 = scmp.eq.s32.totalorder %s21, 1
      %p154 = por %p152, %p153
      %p156 = scmp.ne.s32.totalorder %s141, %s155
      %p157 = scmp.eq.s32.totalorder %s21, 0
      %p158 = por %p156, %p157
      %s159 = ssub.s32 %s15, %s22
      %p160 = scmp.eq.s32.totalorder %s159, 0
      %s162 = sadd.s32 %s161, 1
      %s163 = scalar_select %p160, %s161, %s162
      %p166 = pneg %p160
      %p167 = scmp.eq.s32.totalorder %s15, 1
      %p168 = por %p166, %p167
      %p169 = scmp.ne.s32.totalorder %s161, %s164
      %p170 = scmp.eq.s32.totalorder %s15, 0
      %p171 = por %p169, %p170
      %p172 = scmp.ne.s32.totalorder %s161, %s164
      %p173 = scmp.eq.s32.totalorder %s20, 1
      %p174 = por %p172, %p173
      %p175 = scmp.ne.s32.totalorder %s164, %s165
      %p176 = scmp.eq.s32.totalorder %s20, 0
      %p177 = por %p175, %p176
      %p178 = scmp.ne.s32.totalorder %s164, %s165
      %p179 = scmp.eq.s32.totalorder %s21, 1
      %p180 = por %p178, %p179
      %p182 = scmp.ne.s32.totalorder %s165, %s181
      %p183 = scmp.eq.s32.totalorder %s21, 0
      %p184 = por %p182, %p183
      %p185 = scmp.le.s32.totalorder 1, %s15
      %p186 = scmp.lt.s32.totalorder %s15, 3
      %p187 = pnand %p185, %p186
      %p188 = pneg %p187
      // Predicated region
      $region9: #{tpu_custom_call.1} parent=5 // pred_check
        _
      $region10: #{tpu_custom_call.1} parent=5 // pred_check_branch
        %190 = sbr.rel (%p187) target = $region12
      $region11: #{tpu_custom_call.1} parent=5 // pred_region
        %s191 = ssub.s32 %s15, 1
        // Predicated region
        $region13: #{tpu_custom_call.1} parent=11 // pred_check
          %p192 = pneg %p88
        $region14: #{tpu_custom_call.1} parent=11 // pred_check_branch
          %194 = sbr.rel (%p192) target = $region16
        $region15: #{tpu_custom_call.1} parent=11 // pred_region
          _
        $region16: #{tpu_custom_call.1} parent=11 // pred_fallthru
          _
        // Predicated region
        $region17: #{tpu_custom_call.1} parent=11 // pred_check
          %p195 = pneg %p109
        $region18: #{tpu_custom_call.1} parent=11 // pred_check_branch
          %197 = sbr.rel (%p195) target = $region20
        $region19: #{tpu_custom_call.1} parent=11 // pred_region
          _
        $region20: #{tpu_custom_call.1} parent=11 // pred_fallthru
          _
        // Predicated region
        $region21: #{tpu_custom_call.1} parent=11 // pred_check
          %p198 = pneg %p130
        $region22: #{tpu_custom_call.1} parent=11 // pred_check_branch
          %200 = sbr.rel (%p198) target = $region24
        $region23: #{tpu_custom_call.1} parent=11 // pred_region
          _
        $region24: #{tpu_custom_call.1} parent=11 // pred_fallthru
          _
        // Predicated region
        $region25: #{tpu_custom_call.1} parent=11 // pred_check
          %p201 = pneg %p151
        $region26: #{tpu_custom_call.1} parent=11 // pred_check_branch
          %203 = sbr.rel (%p201) target = $region28
        $region27: #{tpu_custom_call.1} parent=11 // pred_region
          _
        $region28: #{tpu_custom_call.1} parent=11 // pred_fallthru
          _
      $region12: #{tpu_custom_call.1} parent=5 // pred_fallthru
        _
      %p204 = scmp.lt.s32.totalorder %s15, 2
      // Predicated region
      $region29: #{tpu_custom_call.1} parent=5 // pred_check
        %p205 = pneg %p204
      $region30: #{tpu_custom_call.1} parent=5 // pred_check_branch
        %207 = sbr.rel (%p205) target = $region32
      $region31: #{tpu_custom_call.1} parent=5 // pred_region
        // Predicated region
        $region33: #{tpu_custom_call.1} parent=31 // pred_check
          %p208 = pneg %p35
        $region34: #{tpu_custom_call.1} parent=31 // pred_check_branch
          %210 = sbr.rel (%p208) target = $region36
        $region35: #{tpu_custom_call.1} parent=31 // pred_region
          %p211 = scmp.lt.s32.totalorder %s15, 1
          %s212 = scalar_select %p211, %s15, 1
          %s213 = smul.addr %s212, 8
          %s214 = scalar_lea.vmem %s0, %s213
        $region36: #{tpu_custom_call.1} parent=31 // pred_fallthru
          _
        // Predicated region
        $region37: #{tpu_custom_call.1} parent=31 // pred_check
          %p215 = pneg %p61
        $region38: #{tpu_custom_call.1} parent=31 // pred_check_branch
          %217 = sbr.rel (%p215) target = $region40
        $region39: #{tpu_custom_call.1} parent=31 // pred_region
          %p218 = scmp.lt.s32.totalorder %s15, 1
          %s219 = scalar_select %p218, %s15, 1
          %s220 = smul.addr %s219, 8
          %s221 = scalar_lea.vmem %s1, %s220
        $region40: #{tpu_custom_call.1} parent=31 // pred_fallthru
          _
      $region32: #{tpu_custom_call.1} parent=5 // pred_fallthru
        _
      %p222 = scmp.le.s32.totalorder 1, %s15
      %p223 = scmp.lt.s32.totalorder %s15, 3
      %p224 = pnand %p222, %p223
      %p225 = pneg %p224
      // Predicated region
      $region41: #{tpu_custom_call.1} parent=5 // pred_check
        _
      $region42: #{tpu_custom_call.1} parent=5 // pred_check_branch
        %227 = sbr.rel (%p224) target = $region44
      $region43: #{tpu_custom_call.1} parent=5 // pred_region
        %s228 = ssub.s32 %s15, 1
        %p229 = scmp.lt.s32.totalorder %s20, 1
        %s230 = scalar_select %p229, %s20, 1
        %s231 = smul.addr %s230, 8
        %s232 = scalar_lea.vmem %s0, %s231
        %p233 = pneg %p41
        %p234 = pneg %p38
        %p235 = scmp.lt.s32.totalorder %s20, 1
        %s236 = scalar_select %p235, %s20, 1
        %s237 = smul.addr %s236, 8
        %s238 = scalar_lea.vmem %s1, %s237
        %p239 = pneg %p67
        %p240 = pneg %p64
        %p241 = pneg %p88
        %p242 = pneg %p85
        %p243 = pneg %p109
        %p244 = pneg %p106
        %p245 = pneg %p130
        %p246 = pneg %p127
        %p247 = pneg %p151
        %p248 = pneg %p148
        %p249 = pneg %p177
        %p250 = pneg %p174
        %s251 = sand.u32 %s164, 1
        %s252 = scalar_lea.sflag [#allocation3], %s251
        %s253 = sand.u32 %s164, 1
        %s254 = smul.addr %s253, 24
        %s255 = scalar_lea.vmem [#allocation2], %s254
        %p256 = scmp.lt.s32.totalorder %s20, 1
        %s257 = scalar_select %p256, %s20, 1
        %s258 = smul.addr %s257, 8
        %s259 = scalar_lea.vmem %s0, %s258
        %p260 = scmp.lt.s32.totalorder %s20, 1
        %s261 = scalar_select %p260, %s20, 1
        %s262 = smul.addr %s261, 8
        %s263 = scalar_lea.vmem %s1, %s262
        %v264 = vld [vmem:[%s259] sm:$0xff]
        %v265 = vld [vmem:[%s2] sm:$0x7f]
        %v266 = vld [vmem:[%s2 + $0x8] sm:$0x7f]
        %v267 = vld [vmem:[%s2 + $0x10] sm:$0x7f]
        %v268 = vld [vmem:[%s4] sm:$0x7]
        %v270 = vlaneseq
        %v271 = vshrl.u32 %v270, 7
        %v272 = vsub.s32 0, %v271
        %v273 = vrot.slane %v268, %v272
        %v274 = vlaneseq
        %v275 = vshrl.u32 %v274, 7
        %v276 = vsub.s32 1, %v275
        %v277 = vrot.slane %v268, %v276
        %v278 = vlaneseq
        %v279 = vshrl.u32 %v278, 7
        %v280 = vsub.s32 2, %v279
        %v281 = vrot.slane %v268, %v280
        %vm285 = vcmask 56320
        %v287 = vsel %vm285, %v264, 0
        %vm289 = vcmask 1046528
        %v291 = vsel %vm289, %v265, 0
        %v294 = vsel %vm289, %v266, 0
        %v297 = vsel %vm289, %v267, 0
        %299 = vmatprep.subr.mxu0 %v294
        %300 = vmatpush1.msra.mxu0 %v291
        %301 = vmatprep.subr.mxu0 0.0
        %302 = vmatpush1.msra.mxu0 0.0
        %303 = vmatprep.subr.mxu0 0.0
        %304 = vmatpush1.msra.mxu0 0.0
        %305 = vmatprep.subr.mxu0 0.0
        %306 = vmatpush1.msra.mxu0 0.0
        %307 = vmatprep.subr.mxu0 0.0
        %308 = vmatpush1.msra.mxu0 0.0
        %309 = vmatprep.subr.mxu0 0.0
        %310 = vmatpush1.msra.mxu0 0.0
        %311 = vmatprep.subr.mxu0 0.0
        %312 = vmatpush1.msra.mxu0 0.0
        %313 = vmatprep.subr.mxu0 0.0
        %314 = vmatpush1.msra.mxu0 0.0
        %315 = vmatprep.subr.mxu0 0.0
        %316 = vmatpush1.msra.mxu0 0.0
        %317 = vmatprep.subr.mxu0 0.0
        %318 = vmatpush1.msra.mxu0 0.0
        %319 = vmatprep.subr.mxu0 0.0
        %320 = vmatpush1.msra.mxu0 0.0
        %321 = vmatprep.subr.mxu0 0.0
        %322 = vmatpush1.msra.mxu0 0.0
        %323 = vmatprep.subr.mxu0 0.0
        %324 = vmatpush1.msra.mxu0 0.0
        %325 = vmatprep.subr.mxu0 0.0
        %326 = vmatpush1.msra.mxu0 0.0
        %327 = vmatprep.subr.mxu0 0.0
        %328 = vmatpush1.msra.mxu0 0.0
        %329 = vmatprep.subr.mxu0 0.0
        %330 = vmatpush1.msra.mxu0 0.0
        %331 = vmatprep.subr.mxu0 0.0
        %332 = vmatpush1.msra.mxu0 0.0
        %333 = vmatprep.subr.mxu0 0.0
        %334 = vmatpush1.msra.mxu0 0.0
        %335 = vmatprep.subr.mxu0 0.0
        %336 = vmatpush1.msra.mxu0 0.0
        %337 = vmatprep.subr.mxu0 0.0
        %338 = vmatpush1.msra.mxu0 0.0
        %339 = vmatprep.subr.mxu0 0.0
        %340 = vmatpush1.msra.mxu0 0.0
        %341 = vmatprep.subr.mxu0 0.0
        %342 = vmatpush1.msra.mxu0 0.0
        %343 = vmatprep.subr.mxu0 0.0
        %344 = vmatpush1.msra.mxu0 0.0
        %345 = vmatprep.subr.mxu0 0.0
        %346 = vmatpush1.msra.mxu0 0.0
        %347 = vmatprep.subr.mxu0 0.0
        %348 = vmatpush1.msra.mxu0 0.0
        %349 = vmatprep.subr.mxu0 0.0
        %350 = vmatpush1.msra.mxu0 0.0
        %351 = vmatprep.subr.mxu0 0.0
        %352 = vmatpush1.msra.mxu0 0.0
        %353 = vmatprep.subr.mxu0 0.0
        %354 = vmatpush1.msra.mxu0 0.0
        %355 = vmatprep.subr.mxu0 0.0
        %356 = vmatpush1.msra.mxu0 0.0
        %357 = vmatprep.subr.mxu0 0.0
        %358 = vmatpush1.msra.mxu0 0.0
        %359 = vmatprep.subr.mxu0 0.0
        %360 = vmatpush1.msra.mxu0 0.0
        %361 = vmatprep.subr.mxu0 0.0
        %362 = vmatpush1.msra.mxu0 0.0
        %363 = vmatprep.mubr.f32.mxu0 0.0
        %364 = vmatmul.mubr.f32.gmra.mrb[0].mxu0 %v287
        %v365 = vpop.f32.mrb[0].mxu0
        %v366 = vadd.f32 %v273, %v365
        %v367 = vpop.f32.mrb[0].mxu0
        %v368 = vadd.f32 %v277, %v367
        %369 = vdwg.mxu0
        %370 = vmatprep.subr.mxu0 0.0
        %371 = vmatpush1.msra.mxu0 %v297
        %372 = vmatprep.subr.mxu0 0.0
        %373 = vmatpush1.msra.mxu0 0.0
        %374 = vmatprep.subr.mxu0 0.0
        %375 = vmatpush1.msra.mxu0 0.0
        %376 = vmatprep.subr.mxu0 0.0
        %377 = vmatpush1.msra.mxu0 0.0
        %378 = vmatprep.subr.mxu0 0.0
        %379 = vmatpush1.msra.mxu0 0.0
        %380 = vmatprep.subr.mxu0 0.0
        %381 = vmatpush1.msra.mxu0 0.0
        %382 = vmatprep.subr.mxu0 0.0
        %383 = vmatpush1.msra.mxu0 0.0
        %384 = vmatprep.subr.mxu0 0.0
        %385 = vmatpush1.msra.mxu0 0.0
        %386 = vmatprep.subr.mxu0 0.0
        %387 = vmatpush1.msra.mxu0 0.0
        %388 = vmatprep.subr.mxu0 0.0
        %389 = vmatpush1.msra.mxu0 0.0
        %390 = vmatprep.subr.mxu0 0.0
        %391 = vmatpush1.msra.mxu0 0.0
        %392 = vmatprep.subr.mxu0 0.0
        %393 = vmatpush1.msra.mxu0 0.0
        %394 = vmatprep.subr.mxu0 0.0
        %395 = vmatpush1.msra.mxu0 0.0
        %396 = vmatprep.subr.mxu0 0.0
        %397 = vmatpush1.msra.mxu0 0.0
        %398 = vmatprep.subr.mxu0 0.0
        %399 = vmatpush1.msra.mxu0 0.0
        %400 = vmatprep.subr.mxu0 0.0
        %401 = vmatpush1.msra.mxu0 0.0
        %402 = vmatprep.subr.mxu0 0.0
        %403 = vmatpush1.msra.mxu0 0.0
        %404 = vmatprep.subr.mxu0 0.0
        %405 = vmatpush1.msra.mxu0 0.0
        %406 = vmatprep.subr.mxu0 0.0
        %407 = vmatpush1.msra.mxu0 0.0
        %408 = vmatprep.subr.mxu0 0.0
        %409 = vmatpush1.msra.mxu0 0.0
        %410 = vmatprep.subr.mxu0 0.0
        %411 = vmatpush1.msra.mxu0 0.0
        %412 = vmatprep.subr.mxu0 0.0
        %413 = vmatpush1.msra.mxu0 0.0
        %414 = vmatprep.subr.mxu0 0.0
        %415 = vmatpush1.msra.mxu0 0.0
        %416 = vmatprep.subr.mxu0 0.0
        %417 = vmatpush1.msra.mxu0 0.0
        %418 = vmatprep.subr.mxu0 0.0
        %419 = vmatpush1.msra.mxu0 0.0
        %420 = vmatprep.subr.mxu0 0.0
        %421 = vmatpush1.msra.mxu0 0.0
        %422 = vmatprep.subr.mxu0 0.0
        %423 = vmatpush1.msra.mxu0 0.0
        %424 = vmatprep.subr.mxu0 0.0
        %425 = vmatpush1.msra.mxu0 0.0
        %426 = vmatprep.subr.mxu0 0.0
        %427 = vmatpush1.msra.mxu0 0.0
        %428 = vmatprep.subr.mxu0 0.0
        %429 = vmatpush1.msra.mxu0 0.0
        %430 = vmatprep.subr.mxu0 0.0
        %431 = vmatpush1.msra.mxu0 0.0
        %432 = vmatprep.subr.mxu0 0.0
        %433 = vmatpush1.msra.mxu0 0.0
        %434 = vmatprep.mubr.f32.mxu0 0.0
        %435 = vmatmul.mubr.f32.gmra.mrb[0].mxu0 %v287
        %v436 = vpop.f32.mrb[0].mxu0
        %v437 = vadd.f32 %v281, %v436
        %v438 = vpop.f32.mrb[0].mxu0
        %439 = vdwg.mxu0
        %440 = vst [vmem:[%s255] sm:$0xff] %v366
        %441 = vst [vmem:[%s255 + $0x8] sm:$0xff] %v368
        %vm442 = vcmask 523264
        %443 = vst.msk [vmem:[%s255 + $0x10] sm:$0xff] %vm442, %v437
        %v444 = vld [vmem:[%s3] sm:$0xff]
        %v445 = vld [vmem:[%s3 + $0x8] sm:$0x7f]
        %v446 = vld [vmem:[%s263] sm:$0xff]
        %v447 = vlaneseq
        %v448 = vand.u32 %v447, 127
        %449 = vset.pattern.permute.xlu0 0
        %450 = vperm.xlu0 %449, %v446
        %v451 = vpop.permute.xlu0 %450
        %vm452 = vcmp.eq.s32.totalorder %v448, %v451
        %v453 = vsel %vm452, 1, 0
        %v454 = vcvt.s32.f32 %v453
        %v455 = vld [vmem:[%s5] sm:$0x1]
        %v456 = vlaneseq
        %v457 = vshrl.u32 %v456, 7
        %v458 = vsub.s32 0, %v457
        %v459 = vrot.slane %v455, %v458
        %vm460 = vcmask 121856
        %v462 = vsel %vm460, %v454, 0
        %v465 = vsel %vm289, %v445, 0
        %467 = vmatprep.subr.mxu0 0.0
        %468 = vmatpush1.msra.mxu0 %v444
        %469 = vmatprep.subr.mxu0 0.0
        %470 = vmatpush1.msra.mxu0 %v465
        %471 = vmatprep.subr.mxu0 0.0
        %472 = vmatpush1.msra.mxu0 0.0
        %473 = vmatprep.subr.mxu0 0.0
        %474 = vmatpush1.msra.mxu0 0.0
        %475 = vmatprep.subr.mxu0 0.0
        %476 = vmatpush1.msra.mxu0 0.0
        %477 = vmatprep.subr.mxu0 0.0
        %478 = vmatpush1.msra.mxu0 0.0
        %479 = vmatprep.subr.mxu0 0.0
        %480 = vmatpush1.msra.mxu0 0.0
        %481 = vmatprep.subr.mxu0 0.0
        %482 = vmatpush1.msra.mxu0 0.0
        %483 = vmatprep.subr.mxu0 0.0
        %484 = vmatpush1.msra.mxu0 0.0
        %485 = vmatprep.subr.mxu0 0.0
        %486 = vmatpush1.msra.mxu0 0.0
        %487 = vmatprep.subr.mxu0 0.0
        %488 = vmatpush1.msra.mxu0 0.0
        %489 = vmatprep.subr.mxu0 0.0
        %490 = vmatpush1.msra.mxu0 0.0
        %491 = vmatprep.subr.mxu0 0.0
        %492 = vmatpush1.msra.mxu0 0.0
        %493 = vmatprep.subr.mxu0 0.0
        %494 = vmatpush1.msra.mxu0 0.0
        %495 = vmatprep.subr.mxu0 0.0
        %496 = vmatpush1.msra.mxu0 0.0
        %497 = vmatprep.subr.mxu0 0.0
        %498 = vmatpush1.msra.mxu0 0.0
        %499 = vmatprep.subr.mxu0 0.0
        %500 = vmatpush1.msra.mxu0 0.0
        %501 = vmatprep.subr.mxu0 0.0
        %502 = vmatpush1.msra.mxu0 0.0
        %503 = vmatprep.subr.mxu0 0.0
        %504 = vmatpush1.msra.mxu0 0.0
        %505 = vmatprep.subr.mxu0 0.0
        %506 = vmatpush1.msra.mxu0 0.0
        %507 = vmatprep.subr.mxu0 0.0
        %508 = vmatpush1.msra.mxu0 0.0
        %509 = vmatprep.subr.mxu0 0.0
        %510 = vmatpush1.msra.mxu0 0.0
        %511 = vmatprep.subr.mxu0 0.0
        %512 = vmatpush1.msra.mxu0 0.0
        %513 = vmatprep.subr.mxu0 0.0
        %514 = vmatpush1.msra.mxu0 0.0
        %515 = vmatprep.subr.mxu0 0.0
        %516 = vmatpush1.msra.mxu0 0.0
        %517 = vmatprep.subr.mxu0 0.0
        %518 = vmatpush1.msra.mxu0 0.0
        %519 = vmatprep.subr.mxu0 0.0
        %520 = vmatpush1.msra.mxu0 0.0
        %521 = vmatprep.subr.mxu0 0.0
        %522 = vmatpush1.msra.mxu0 0.0
        %523 = vmatprep.subr.mxu0 0.0
        %524 = vmatpush1.msra.mxu0 0.0
        %525 = vmatprep.subr.mxu0 0.0
        %526 = vmatpush1.msra.mxu0 0.0
        %527 = vmatprep.subr.mxu0 0.0
        %528 = vmatpush1.msra.mxu0 0.0
        %529 = vmatprep.subr.mxu0 0.0
        %530 = vmatpush1.msra.mxu0 0.0
        %531 = vmatprep.mubr.f32.mxu0 0.0
        %532 = vmatmul.mubr.f32.gmra.mrb[0].mxu0 %v462
        %v533 = vpop.f32.mrb[0].mxu0
        %v534 = vadd.f32 %v459, %v533
        %v535 = vpop.f32.mrb[0].mxu0
        %536 = vdwg.mxu0
        %538 = vrot.lane.b32.xlu0 %v534, 96
        %v539 = vpop.permute.xlu0 %538
        %vm541 = vcmask 1048320
        %542 = vst.msk [vmem:[%s255 + $0x8] sm:$0xff] %vm541, %v539
        %543 = vset.pattern.permute.xlu0 1
        %544 = vperm.xlu0 %543, %v446
        %v545 = vpop.permute.xlu0 %544
        %vm546 = vcmp.eq.s32.totalorder %v448, %v545
        %v547 = vsel %vm546, 1, 0
        %v548 = vcvt.s32.f32 %v547
        %v549 = vld [vmem:[%s5 + $0x1] sm:$0x1]
        %v550 = vlaneseq
        %v551 = vshrl.u32 %v550, 7
        %v552 = vsub.s32 0, %v551
        %v553 = vrot.slane %v549, %v552
        %v555 = vsel %vm460, %v548, 0
        %557 = vmatprep.subr.mxu0 0.0
        %558 = vmatpush1.msra.mxu0 %v444
        %559 = vmatprep.subr.mxu0 0.0
        %560 = vmatpush1.msra.mxu0 %v465
        %561 = vmatprep.subr.mxu0 0.0
        %562 = vmatpush1.msra.mxu0 0.0
        %563 = vmatprep.subr.mxu0 0.0
        %564 = vmatpush1.msra.mxu0 0.0
        %565 = vmatprep.subr.mxu0 0.0
        %566 = vmatpush1.msra.mxu0 0.0
        %567 = vmatprep.subr.mxu0 0.0
        %568 = vmatpush1.msra.mxu0 0.0
        %569 = vmatprep.subr.mxu0 0.0
        %570 = vmatpush1.msra.mxu0 0.0
        %571 = vmatprep.subr.mxu0 0.0
        %572 = vmatpush1.msra.mxu0 0.0
        %573 = vmatprep.subr.mxu0 0.0
        %574 = vmatpush1.msra.mxu0 0.0
        %575 = vmatprep.subr.mxu0 0.0
        %576 = vmatpush1.msra.mxu0 0.0
        %577 = vmatprep.subr.mxu0 0.0
        %578 = vmatpush1.msra.mxu0 0.0
        %579 = vmatprep.subr.mxu0 0.0
        %580 = vmatpush1.msra.mxu0 0.0
        %581 = vmatprep.subr.mxu0 0.0
        %582 = vmatpush1.msra.mxu0 0.0
        %583 = vmatprep.subr.mxu0 0.0
        %584 = vmatpush1.msra.mxu0 0.0
        %585 = vmatprep.subr.mxu0 0.0
        %586 = vmatpush1.msra.mxu0 0.0
        %587 = vmatprep.subr.mxu0 0.0
        %588 = vmatpush1.msra.mxu0 0.0
        %589 = vmatprep.subr.mxu0 0.0
        %590 = vmatpush1.msra.mxu0 0.0
        %591 = vmatprep.subr.mxu0 0.0
        %592 = vmatpush1.msra.mxu0 0.0
        %593 = vmatprep.subr.mxu0 0.0
        %594 = vmatpush1.msra.mxu0 0.0
        %595 = vmatprep.subr.mxu0 0.0
        %596 = vmatpush1.msra.mxu0 0.0
        %597 = vmatprep.subr.mxu0 0.0
        %598 = vmatpush1.msra.mxu0 0.0
        %599 = vmatprep.subr.mxu0 0.0
        %600 = vmatpush1.msra.mxu0 0.0
        %601 = vmatprep.subr.mxu0 0.0
        %602 = vmatpush1.msra.mxu0 0.0
        %603 = vmatprep.subr.mxu0 0.0
        %604 = vmatpush1.msra.mxu0 0.0
        %605 = vmatprep.subr.mxu0 0.0
        %606 = vmatpush1.msra.mxu0 0.0
        %607 = vmatprep.subr.mxu0 0.0
        %608 = vmatpush1.msra.mxu0 0.0
        %609 = vmatprep.subr.mxu0 0.0
        %610 = vmatpush1.msra.mxu0 0.0
        %611 = vmatprep.subr.mxu0 0.0
        %612 = vmatpush1.msra.mxu0 0.0
        %613 = vmatprep.subr.mxu0 0.0
        %614 = vmatpush1.msra.mxu0 0.0
        %615 = vmatprep.subr.mxu0 0.0
        %616 = vmatpush1.msra.mxu0 0.0
        %617 = vmatprep.subr.mxu0 0.0
        %618 = vmatpush1.msra.mxu0 0.0
        %619 = vmatprep.subr.mxu0 0.0
        %620 = vmatpush1.msra.mxu0 0.0
        %621 = vmatprep.mubr.f32.mxu0 0.0
        %622 = vmatmul.mubr.f32.gmra.mrb[0].mxu0 %v555
        %v623 = vpop.f32.mrb[0].mxu0
        %v624 = vadd.f32 %v553, %v623
        %v625 = vpop.f32.mrb[0].mxu0
        %626 = vdwg.mxu0
        %vm627 = vcmask 261120
        %628 = vst.msk [vmem:[%s255 + $0x10] sm:$0xff] %vm627, %v624
        %629 = vset.pattern.permute.xlu0 2
        %630 = vperm.xlu0 %629, %v446
        %v631 = vpop.permute.xlu0 %630
        %vm632 = vcmp.eq.s32.totalorder %v448, %v631
        %v633 = vsel %vm632, 1, 0
        %v634 = vcvt.s32.f32 %v633
        %v635 = vld [vmem:[%s5 + $0x2] sm:$0x1]
        %v636 = vlaneseq
        %v637 = vshrl.u32 %v636, 7
        %v638 = vsub.s32 0, %v637
        %v639 = vrot.slane %v635, %v638
        %v641 = vsel %vm460, %v634, 0
        %643 = vmatprep.subr.mxu0 0.0
        %644 = vmatpush1.msra.mxu0 %v444
        %645 = vmatprep.subr.mxu0 0.0
        %646 = vmatpush1.msra.mxu0 %v465
        %647 = vmatprep.subr.mxu0 0.0
        %648 = vmatpush1.msra.mxu0 0.0
        %649 = vmatprep.subr.mxu0 0.0
        %650 = vmatpush1.msra.mxu0 0.0
        %651 = vmatprep.subr.mxu0 0.0
        %652 = vmatpush1.msra.mxu0 0.0
        %653 = vmatprep.subr.mxu0 0.0
        %654 = vmatpush1.msra.mxu0 0.0
        %655 = vmatprep.subr.mxu0 0.0
        %656 = vmatpush1.msra.mxu0 0.0
        %657 = vmatprep.subr.mxu0 0.0
        %658 = vmatpush1.msra.mxu0 0.0
        %659 = vmatprep.subr.mxu0 0.0
        %660 = vmatpush1.msra.mxu0 0.0
        %661 = vmatprep.subr.mxu0 0.0
        %662 = vmatpush1.msra.mxu0 0.0
        %663 = vmatprep.subr.mxu0 0.0
        %664 = vmatpush1.msra.mxu0 0.0
        %665 = vmatprep.subr.mxu0 0.0
        %666 = vmatpush1.msra.mxu0 0.0
        %667 = vmatprep.subr.mxu0 0.0
        %668 = vmatpush1.msra.mxu0 0.0
        %669 = vmatprep.subr.mxu0 0.0
        %670 = vmatpush1.msra.mxu0 0.0
        %671 = vmatprep.subr.mxu0 0.0
        %672 = vmatpush1.msra.mxu0 0.0
        %673 = vmatprep.subr.mxu0 0.0
        %674 = vmatpush1.msra.mxu0 0.0
        %675 = vmatprep.subr.mxu0 0.0
        %676 = vmatpush1.msra.mxu0 0.0
        %677 = vmatprep.subr.mxu0 0.0
        %678 = vmatpush1.msra.mxu0 0.0
        %679 = vmatprep.subr.mxu0 0.0
        %680 = vmatpush1.msra.mxu0 0.0
        %681 = vmatprep.subr.mxu0 0.0
        %682 = vmatpush1.msra.mxu0 0.0
        %683 = vmatprep.subr.mxu0 0.0
        %684 = vmatpush1.msra.mxu0 0.0
        %685 = vmatprep.subr.mxu0 0.0
        %686 = vmatpush1.msra.mxu0 0.0
        %687 = vmatprep.subr.mxu0 0.0
        %688 = vmatpush1.msra.mxu0 0.0
        %689 = vmatprep.subr.mxu0 0.0
        %690 = vmatpush1.msra.mxu0 0.0
        %691 = vmatprep.subr.mxu0 0.0
        %692 = vmatpush1.msra.mxu0 0.0
        %693 = vmatprep.subr.mxu0 0.0
        %694 = vmatpush1.msra.mxu0 0.0
        %695 = vmatprep.subr.mxu0 0.0
        %696 = vmatpush1.msra.mxu0 0.0
        %697 = vmatprep.subr.mxu0 0.0
        %698 = vmatpush1.msra.mxu0 0.0
        %699 = vmatprep.subr.mxu0 0.0
        %700 = vmatpush1.msra.mxu0 0.0
        %701 = vmatprep.subr.mxu0 0.0
        %702 = vmatpush1.msra.mxu0 0.0
        %703 = vmatprep.subr.mxu0 0.0
        %704 = vmatpush1.msra.mxu0 0.0
        %705 = vmatprep.subr.mxu0 0.0
        %706 = vmatpush1.msra.mxu0 0.0
        %707 = vmatprep.mubr.f32.mxu0 0.0
        %708 = vmatmul.mubr.f32.gmra.mrb[0].mxu0 %v641
        %v709 = vpop.f32.mrb[0].mxu0
        %v710 = vadd.f32 %v639, %v709
        %v711 = vpop.f32.mrb[0].mxu0
        %712 = vdwg.mxu0
        %714 = vrot.lane.b32.xlu0 %v710, 32
        %v715 = vpop.permute.xlu0 %714
        %vm717 = vcmask 523520
        %718 = vst.msk [vmem:[%s255 + $0x10] sm:$0xff] %vm717, %v715
        %s719 = sand.u32 %s164, 1
        %s720 = scalar_lea.sflag [#allocation3], %s719
        %s721 = sand.u32 %s164, 1
        %s722 = smul.addr %s721, 24
        %s723 = scalar_lea.vmem [#allocation2], %s722
        // Predicated region
        $region45: #{tpu_custom_call.1} parent=43 // pred_check
          %p724 = pneg %p174
        $region46: #{tpu_custom_call.1} parent=43 // pred_check_branch
          %726 = sbr.rel (%p724) target = $region48
        $region47: #{tpu_custom_call.1} parent=43 // pred_region
          %s728 = ssub.s32 384, 384
          %729 = vsyncadd %s720, %s728
          %s730 = smul.addr %s20, 3
          %s731 = smul.addr %s730, 128
          %s732 = scalar_lea.hbm %s6, %s731
          %s734 = sshll.u32 %s723, 4
          %s735 = int_to_ptr.vmem [resolvable:$true] %s734
          %737 = dma.vmem_to_hbm [thread:$0]  %s735, 384, %s732, %s720
        $region48: #{tpu_custom_call.1} parent=43 // pred_fallthru
          _
      $region44: #{tpu_custom_call.1} parent=5 // pred_fallthru
        _
      %p738 = scmp.le.s32.totalorder 2, %s15
      // Predicated region
      $region49: #{tpu_custom_call.1} parent=5 // pred_check
        %p739 = pneg %p738
      $region50: #{tpu_custom_call.1} parent=5 // pred_check_branch
        %741 = sbr.rel (%p739) target = $region52
      $region51: #{tpu_custom_call.1} parent=5 // pred_region
        %s742 = ssub.s32 %s15, 2
        // Predicated region
        $region53: #{tpu_custom_call.1} parent=51 // pred_check
          %p743 = pneg %p180
        $region54: #{tpu_custom_call.1} parent=51 // pred_check_branch
          %745 = sbr.rel (%p743) target = $region56
        $region55: #{tpu_custom_call.1} parent=51 // pred_region
          %s746 = sand.u32 %s165, 1
          %s747 = scalar_lea.sflag [#allocation3], %s746
          %s748 = sand.u32 %s165, 1
          %s749 = smul.addr %s748, 24
          %s750 = scalar_lea.vmem [#allocation2], %s749
          %751 = dma.done %s747, 384
        $region56: #{tpu_custom_call.1} parent=51 // pred_fallthru
          _
      $region52: #{tpu_custom_call.1} parent=5 // pred_fallthru
        _
    $region6: #{tpu_custom_call.1} parent=1 // loop_footer
      %s19 = sadd.s32 1, %s15
    $region7: #{tpu_custom_call.1} parent=1 // loop_footer_branch
      %14 = sbr.rel target = $region3
    $region8: #{tpu_custom_call.1} parent=1 // loop_exit
      _
    %752 = vsyncpa [#allocation3], 1
    %s753 = scalar_lea.sflag [#allocation3], 1
    %754 = vsyncpa %s753, 1

</llo_original>
